<compile_context>
chip_gen: v6e
topology: v6e:2x2x1
jax: 0.10.0
libtpu: 0.0.40
codegen_flags: <defaults>
</compile_context>

<pallas_src>
import math
import functools

import jax
import jax.numpy as jnp
from jax import lax
from jax.experimental import pallas as pl
from jax.experimental.pallas import tpu as pltpu

# ----------------------------- model dims -----------------------------------
B = 2            # batch
S = 8            # sequence length
D = 32           # d_model
H = 4            # num_heads
HD = D // H      # head_dim
FFN = 64         # ffn_hidden
EPS = 1e-5
NEG_INF = -1e9   # additive mask value for cross-batch score entries


# ------------------------------ kernel ---------------------------------------
def _layernorm(z, g, b, eps=EPS):
    mean = jnp.mean(z, axis=-1, keepdims=True)
    var = jnp.mean((z - mean) ** 2, axis=-1, keepdims=True)
    # rsqrt -> EUP slot (idle here), no VPU divide
    return g * ((z - mean) * lax.rsqrt(var + eps)) + b


def encoder_layer_kernel(num_heads, head_dim, scale,
                         x_ref, mask_ref,
                         wqkv_ref, bqkv_ref, wo_ref, bo_ref,
                         g1_ref, be1_ref,
                         w1_ref, fb1_ref, w2_ref, fb2_ref,
                         g2_ref, be2_ref,
                         out_ref):
    d_model = num_heads * head_dim
    x = x_ref[...]                                   # (R, D), R = B*S

    # ---- fused QKV projection (one MXU push); columns pre-permuted by the
    # wrapper to [Q(head-major) | K(head-major) | V(head-major)] ----
    qkv = jnp.dot(x, wqkv_ref[...],
                  preferred_element_type=jnp.float32) + bqkv_ref[...]   # (R, 3D)
    q_all = qkv[:, 0 * d_model:1 * d_model]          # three coarse 32-lane blocks
    k_all = qkv[:, 1 * d_model:2 * d_model]
    v_all = qkv[:, 2 * d_model:3 * d_model]

    big_mask = mask_ref[...]                         # (R, R), loaded once; contains the
                                                     # user mask per batch block and -1e9
                                                     # on cross-batch entries.

    # Hoisted out of the head loop (broadcast/iota are not CSE'd by JAX).
    lane = lax.broadcasted_iota(jnp.int32, (1, d_model), 1)

    vals = jnp.zeros_like(x)                         # (R, D), head-major columns
    for h in range(num_heads):                       # static unroll, H=4
        lo = h * head_dim
        head_mask = ((lane >= lo) & (lane < lo + head_dim)).astype(jnp.float32)
        # Zero the other heads' lanes (VPU); contracting the full D then gives
        # exactly the per-head Q.K^T (cross-head terms multiply by 0).
        q_h = q_all * head_mask                      # (R, D)
        s = lax.dot_general(q_h, k_all, (((1,), (1,)), ((), ())),
                            preferred_element_type=jnp.float32)          # (R, R)
        s = s * scale + big_mask
        s = s - jnp.max(s, axis=-1, keepdims=True)   # stable softmax
        p = jnp.exp(s)
        p = p / jnp.sum(p, axis=-1, keepdims=True)   # exact divide (EUP has slack)
        # PV with the head's V lanes; cross-batch rows of p are exactly 0,
        # other heads' columns of v_h are exactly 0 -> vals accumulates each
        # head's output into its own lane block (no concat needed).
        v_h = v_all * head_mask
        vals = vals + jnp.dot(p, v_h, preferred_element_type=jnp.float32)

    attn = jnp.dot(vals, wo_ref[...],
                   preferred_element_type=jnp.float32) + bo_ref[...]

    # dropout1 -> identity (inference)
    x1 = _layernorm(attn + x, g1_ref[...], be1_ref[...])

    # ---- position-wise feed forward ----
    hfc = jnp.dot(x1, w1_ref[...], preferred_element_type=jnp.float32) + fb1_ref[...]
    hfc = jnp.maximum(hfc, 0.0)
    # dropout inside FFN -> identity (inference)
    y = jnp.dot(hfc, w2_ref[...], preferred_element_type=jnp.float32) + fb2_ref[...]

    # dropout2 -> identity (inference)
    out_ref[...] = _layernorm(y + x1, g2_ref[...], be2_ref[...])


# ------------------------------ wrapper ---------------------------------------
def _full_spec(shape):
    nd = len(shape)
    return pl.BlockSpec(shape, lambda i, _nd=nd: (0,) * _nd)


def _permute_qkv(wqkv, bqkv, d_model, num_heads):
    """Re-order the fused QKV weight from per-head [q_h|k_h|v_h] blocks to
    [Q_allheads | K_allheads | V_allheads] (head-major within each block)."""
    hd = d_model // num_heads
    w = wqkv.reshape(d_model, num_heads, 3, hd)      # cols: (head, {q,k,v}, hd)
    b = bqkv.reshape(num_heads, 3, hd)
    wq = w[:, :, 0, :].reshape(d_model, d_model)
    wk = w[:, :, 1, :].reshape(d_model, d_model)
    wv = w[:, :, 2, :].reshape(d_model, d_model)
    bq = b[:, 0, :].reshape(1, d_model)
    bk = b[:, 1, :].reshape(1, d_model)
    bv = b[:, 2, :].reshape(1, d_model)
    return (jnp.concatenate([wq, wk, wv], axis=1),
            jnp.concatenate([bq, bk, bv], axis=1))


def _block_diag_mask(mask):
    """(B, S, S) additive mask -> (B*S, B*S) block-diagonal additive mask with
    NEG_INF on cross-batch entries (exp underflows to exactly 0 after the row-max
    subtraction, so batched softmax over B*S columns == per-batch softmax)."""
    b, s, _ = mask.shape
    big = jnp.full((b, s, b, s), NEG_INF, mask.dtype)
    idx = jnp.arange(b)
    big = big.at[idx, :, idx, :].set(mask)
    return big.reshape(b * s, b * s)


def encoder_layer(x, mask, params, *, num_heads=H):
    b, s, d = x.shape
    hd = d // num_heads
    ffn = params["W1"].shape[1]
    rows = b * s

    x2d = x.reshape(rows, d)                 # fold batch into matmul rows
    big_mask = _block_diag_mask(mask)        # (rows, rows)
    wqkv_p, bqkv_p = _permute_qkv(params["Wqkv"], params["bqkv"], d, num_heads)

    args = (
        x2d, big_mask,
        wqkv_p, bqkv_p,
        params["Wo"], params["bo"].reshape(1, d),
        params["gamma1"].reshape(1, d), params["beta1"].reshape(1, d),
        params["W1"], params["b1"].reshape(1, ffn),
        params["W2"], params["b2"].reshape(1, d),
        params["gamma2"].reshape(1, d), params["beta2"].reshape(1, d),
    )
    in_specs = [_full_spec(a.shape) for a in args]

    kernel = functools.partial(encoder_layer_kernel,
                               num_heads, hd, 1.0 / math.sqrt(hd))

    # Single grid step: everything (weights + activations, ~35 KB) lives in VMEM
    # for the whole call on every chip generation.
    # TODO(synk): when this layer is part of a multi-layer encoder, fuse the
    # layers into one pallas_call (grid over layer index, stacked weights) to
    # amortize launch + DMA setup, which dominates at these shapes.
    out2d = pl.pallas_call(
        kernel,
        out_shape=jax.ShapeDtypeStruct((rows, d), jnp.float32),
        grid_spec=pltpu.PrefetchScalarGridSpec(
            num_scalar_prefetch=0,
            grid=(1,),
            in_specs=in_specs,
            out_specs=pl.BlockSpec((rows, d), lambda i: (0, 0)),
        ),
        compiler_params=pltpu.CompilerParams(dimension_semantics=("arbitrary",)),
    )(*args)
    return out2d.reshape(b, s, d)


# --------------------------- pure-JAX reference -------------------------------
def _ln_ref(z, g, b, eps=EPS):
    mean = jnp.mean(z, axis=-1, keepdims=True)
    var = jnp.mean((z - mean) ** 2, axis=-1, keepdims=True)
    return g * ((z - mean) / jnp.sqrt(var + eps)) + b


def encoder_layer_ref(x, mask, p):
    b, s, d = x.shape
    hd = d // H
    qkv = x @ p["Wqkv"] + p["bqkv"]
    qkv = qkv.reshape(b, s, H, 3 * hd).transpose(0, 2, 1, 3)
    q, k, v = jnp.split(qkv, 3, axis=-1)
    scaled = jnp.einsum("bhqd,bhkd->bhqk", q, k) / math.sqrt(hd)
    scaled = scaled + mask[:, None, :, :]
    attn = jax.nn.softmax(scaled, axis=-1)
    vals = jnp.einsum("bhqk,bhkd->bhqd", attn, v)
    vals = vals.transpose(0, 2, 1, 3).reshape(b, s, d)
    out = vals @ p["Wo"] + p["bo"]
    x1 = _ln_ref(out + x, p["gamma1"], p["beta1"])
    hfc = jnp.maximum(x1 @ p["W1"] + p["b1"], 0.0)
    y = hfc @ p["W2"] + p["b2"]
    return _ln_ref(y + x1, p["gamma2"], p["beta2"])


# ------------------------------- main -----------------------------------------
if __name__ == "__main__":
    key = jax.random.PRNGKey(0)
    ks = jax.random.split(key, 12)

    params = {
        "Wqkv":  jax.random.normal(ks[0], (D, 3 * D), jnp.float32) * 0.1,
        "bqkv":  jax.random.normal(ks[1], (3 * D,), jnp.float32) * 0.05,
        "Wo":    jax.random.normal(ks[2], (D, D), jnp.float32) * 0.1,
        "bo":    jax.random.normal(ks[3], (D,), jnp.float32) * 0.05,
        "gamma1": jnp.ones((D,), jnp.float32),
        "beta1":  jnp.zeros((D,), jnp.float32),
        "W1":    jax.random.normal(ks[4], (D, FFN), jnp.float32) * 0.1,
        "b1":    jax.random.normal(ks[5], (FFN,), jnp.float32) * 0.05,
        "W2":    jax.random.normal(ks[6], (FFN, D), jnp.float32) * 0.1,
        "b2":    jax.random.normal(ks[7], (D,), jnp.float32) * 0.05,
        "gamma2": jnp.ones((D,), jnp.float32),
        "beta2":  jnp.zeros((D,), jnp.float32),
    }

    x = jax.random.normal(ks[8], (B, S, D), jnp.float32)
    # causal additive mask, shared across batch (per-batch copies kept so the
    # kernel preserves the module's general per-batch mask semantics)
    causal = jnp.where(jnp.tril(jnp.ones((S, S), jnp.bool_)), 0.0, -1e9).astype(jnp.float32)
    mask = jnp.broadcast_to(causal, (B, S, S))

    out = jax.block_until_ready(encoder_layer(x, mask, params))

    # Reference at HIGHEST matmul precision so the comparison is meaningful at
    # f32 accuracy; kernel matmuls are f32 (multi-pass) as well.
    with jax.default_matmul_precision("highest"):
        ref = jax.block_until_ready(encoder_layer_ref(x, mask, params))

    # Tight tolerance (1e-4): expected numerical differences are ~1e-6; real
    # bugs (wrong mask/scale/head mixing) produce O(0.1-1) errors.
    assert jnp.allclose(out, ref, rtol=1e-4, atol=1e-4), "mismatch vs reference"

    print("KERNEL_OK")
</pallas_src>

<mosaic_0001>
module attributes {stable_mosaic.version = 11 : i64} {
  func.func @encoder_layer_kernel(%arg0: i32, %arg1: memref<16x32xf32, #tpu.memory_space<vmem>>, %arg2: memref<16x16xf32, #tpu.memory_space<vmem>>, %arg3: memref<32x96xf32, #tpu.memory_space<vmem>>, %arg4: memref<1x96xf32, #tpu.memory_space<vmem>>, %arg5: memref<32x32xf32, #tpu.memory_space<vmem>>, %arg6: memref<1x32xf32, #tpu.memory_space<vmem>>, %arg7: memref<1x32xf32, #tpu.memory_space<vmem>>, %arg8: memref<1x32xf32, #tpu.memory_space<vmem>>, %arg9: memref<32x64xf32, #tpu.memory_space<vmem>>, %arg10: memref<1x64xf32, #tpu.memory_space<vmem>>, %arg11: memref<64x32xf32, #tpu.memory_space<vmem>>, %arg12: memref<1x32xf32, #tpu.memory_space<vmem>>, %arg13: memref<1x32xf32, #tpu.memory_space<vmem>>, %arg14: memref<1x32xf32, #tpu.memory_space<vmem>>, %arg15: memref<16x32xf32, #tpu.memory_space<vmem>>) attributes {dimension_semantics = [#tpu.dimension_semantics<arbitrary>], iteration_bounds = array<i64: 1>, scalar_prefetch = 0 : i64, scratch_operands = 0 : i64, tpu.core_type = #tpu.core_type<tc>, window_params = [{pipeline_mode = #tpu.pipeline_mode<synchronous>, transform_indices = @transform_0, window_bounds = array<i64: 16, 32>}, {pipeline_mode = #tpu.pipeline_mode<synchronous>, transform_indices = @transform_1, window_bounds = array<i64: 16, 16>}, {pipeline_mode = #tpu.pipeline_mode<synchronous>, transform_indices = @transform_2, window_bounds = array<i64: 32, 96>}, {pipeline_mode = #tpu.pipeline_mode<synchronous>, transform_indices = @transform_3, window_bounds = array<i64: 1, 96>}, {pipeline_mode = #tpu.pipeline_mode<synchronous>, transform_indices = @transform_4, window_bounds = array<i64: 32, 32>}, {pipeline_mode = #tpu.pipeline_mode<synchronous>, transform_indices = @transform_5, window_bounds = array<i64: 1, 32>}, {pipeline_mode = #tpu.pipeline_mode<synchronous>, transform_indices = @transform_6, window_bounds = array<i64: 1, 32>}, {pipeline_mode = #tpu.pipeline_mode<synchronous>, transform_indices = @transform_7, window_bounds = array<i64: 1, 32>}, {pipeline_mode = #tpu.pipeline_mode<synchronous>, transform_indices = @transform_8, window_bounds = array<i64: 32, 64>}, {pipeline_mode = #tpu.pipeline_mode<synchronous>, transform_indices = @transform_9, window_bounds = array<i64: 1, 64>}, {pipeline_mode = #tpu.pipeline_mode<synchronous>, transform_indices = @transform_10, window_bounds = array<i64: 64, 32>}, {pipeline_mode = #tpu.pipeline_mode<synchronous>, transform_indices = @transform_11, window_bounds = array<i64: 1, 32>}, {pipeline_mode = #tpu.pipeline_mode<synchronous>, transform_indices = @transform_12, window_bounds = array<i64: 1, 32>}, {pipeline_mode = #tpu.pipeline_mode<synchronous>, transform_indices = @transform_13, window_bounds = array<i64: 1, 32>}, {pipeline_mode = #tpu.pipeline_mode<synchronous>, transform_indices = @transform_14, window_bounds = array<i64: 16, 32>}]} {
    %c0 = arith.constant 0 : index
    %c0_0 = arith.constant 0 : index
    %0 = vector.load %arg1[%c0, %c0_0] : memref<16x32xf32, #tpu.memory_space<vmem>>, vector<16x32xf32>
    %c0_1 = arith.constant 0 : index
    %c0_2 = arith.constant 0 : index
    %1 = vector.load %arg3[%c0_1, %c0_2] : memref<32x96xf32, #tpu.memory_space<vmem>>, vector<32x96xf32>
    %cst = arith.constant dense<0.000000e+00> : vector<16x96xf32>
    %2 = tpu.matmul %0, %1, %cst {dimension_numbers = #tpu.dot_dimension_numbers<[1], [0], [0], [1], [0, 0, 1, 1], [], []>} : vector<16x32xf32>, vector<32x96xf32>, vector<16x96xf32> -> vector<16x96xf32>
    %c0_3 = arith.constant 0 : index
    %c0_4 = arith.constant 0 : index
    %3 = vector.load %arg4[%c0_3, %c0_4] : memref<1x96xf32, #tpu.memory_space<vmem>>, vector<1x96xf32>
    %4 = vector.broadcast %3 : vector<1x96xf32> to vector<16x96xf32>
    %5 = arith.addf %2, %4 : vector<16x96xf32>
    %6 = vector.extract_strided_slice %5 {offsets = [0, 0], sizes = [16, 32], strides = [1, 1]} : vector<16x96xf32> to vector<16x32xf32>
    %7 = vector.extract_strided_slice %5 {offsets = [0, 32], sizes = [16, 32], strides = [1, 1]} : vector<16x96xf32> to vector<16x32xf32>
    %8 = vector.extract_strided_slice %5 {offsets = [0, 64], sizes = [16, 32], strides = [1, 1]} : vector<16x96xf32> to vector<16x32xf32>
    %c0_5 = arith.constant 0 : index
    %c0_6 = arith.constant 0 : index
    %9 = vector.load %arg2[%c0_5, %c0_6] : memref<16x16xf32, #tpu.memory_space<vmem>>, vector<16x16xf32>
    %10 = tpu.iota {dimensions = array<i32: 1>} : vector<1x32xi32>
    %cst_7 = arith.constant 0.000000e+00 : f32
    %11 = vector.broadcast %cst_7 : f32 to vector<16x32xf32>
    %c0_i32 = arith.constant 0 : i32
    %12 = vector.broadcast %c0_i32 : i32 to vector<1x32xi32>
    %13 = arith.cmpi sge, %10, %12 : vector<1x32xi32>
    %c8_i32 = arith.constant 8 : i32
    %14 = vector.broadcast %c8_i32 : i32 to vector<1x32xi32>
    %15 = arith.cmpi slt, %10, %14 : vector<1x32xi32>
    %16 = arith.andi %13, %15 : vector<1x32xi1>
    %17 = arith.extui %16 : vector<1x32xi1> to vector<1x32xi32>
    %18 = arith.sitofp %17 : vector<1x32xi32> to vector<1x32xf32>
    %19 = vector.broadcast %18 : vector<1x32xf32> to vector<16x32xf32>
    %20 = arith.mulf %6, %19 : vector<16x32xf32>
    %cst_8 = arith.constant dense<0.000000e+00> : vector<16x16xf32>
    %21 = tpu.matmul %20, %7, %cst_8 {dimension_numbers = #tpu.dot_dimension_numbers<[1], [1], [0], [0], [0, 0, 1, 0], [], []>} : vector<16x32xf32>, vector<16x32xf32>, vector<16x16xf32> -> vector<16x16xf32>
    %cst_9 = arith.constant 0.353553385 : f32
    %22 = vector.broadcast %cst_9 : f32 to vector<16x16xf32>
    %23 = arith.mulf %21, %22 : vector<16x16xf32>
    %24 = arith.addf %23, %9 : vector<16x16xf32>
    %cst_10 = arith.constant dense<0xFF800000> : vector<16xf32>
    %25 = vector.multi_reduction <maximumf>, %24, %cst_10 [1] : vector<16x16xf32> to vector<16xf32>
    %26 = vector.shape_cast %25 : vector<16xf32> to vector<16x1xf32>
    %27 = vector.broadcast %26 : vector<16x1xf32> to vector<16x16xf32>
    %28 = arith.subf %24, %27 : vector<16x16xf32>
    %29 = math.exp %28 : vector<16x16xf32>
    %cst_11 = arith.constant dense<0.000000e+00> : vector<16xf32>
    %30 = vector.multi_reduction <add>, %29, %cst_11 [1] : vector<16x16xf32> to vector<16xf32>
    %31 = vector.shape_cast %30 : vector<16xf32> to vector<16x1xf32>
    %32 = vector.broadcast %31 : vector<16x1xf32> to vector<16x16xf32>
    %33 = arith.divf %29, %32 : vector<16x16xf32>
    %34 = vector.broadcast %18 : vector<1x32xf32> to vector<16x32xf32>
    %35 = arith.mulf %8, %34 : vector<16x32xf32>
    %cst_12 = arith.constant dense<0.000000e+00> : vector<16x32xf32>
    %36 = tpu.matmul %33, %35, %cst_12 {dimension_numbers = #tpu.dot_dimension_numbers<[1], [0], [0], [1], [0, 0, 1, 1], [], []>} : vector<16x16xf32>, vector<16x32xf32>, vector<16x32xf32> -> vector<16x32xf32>
    %37 = arith.addf %11, %36 : vector<16x32xf32>
    %c8_i32_13 = arith.constant 8 : i32
    %38 = vector.broadcast %c8_i32_13 : i32 to vector<1x32xi32>
    %39 = arith.cmpi sge, %10, %38 : vector<1x32xi32>
    %c16_i32 = arith.constant 16 : i32
    %40 = vector.broadcast %c16_i32 : i32 to vector<1x32xi32>
    %41 = arith.cmpi slt, %10, %40 : vector<1x32xi32>
    %42 = arith.andi %39, %41 : vector<1x32xi1>
    %43 = arith.extui %42 : vector<1x32xi1> to vector<1x32xi32>
    %44 = arith.sitofp %43 : vector<1x32xi32> to vector<1x32xf32>
    %45 = vector.broadcast %44 : vector<1x32xf32> to vector<16x32xf32>
    %46 = arith.mulf %6, %45 : vector<16x32xf32>
    %cst_14 = arith.constant dense<0.000000e+00> : vector<16x16xf32>
    %47 = tpu.matmul %46, %7, %cst_14 {dimension_numbers = #tpu.dot_dimension_numbers<[1], [1], [0], [0], [0, 0, 1, 0], [], []>} : vector<16x32xf32>, vector<16x32xf32>, vector<16x16xf32> -> vector<16x16xf32>
    %cst_15 = arith.constant 0.353553385 : f32
    %48 = vector.broadcast %cst_15 : f32 to vector<16x16xf32>
    %49 = arith.mulf %47, %48 : vector<16x16xf32>
    %50 = arith.addf %49, %9 : vector<16x16xf32>
    %cst_16 = arith.constant dense<0xFF800000> : vector<16xf32>
    %51 = vector.multi_reduction <maximumf>, %50, %cst_16 [1] : vector<16x16xf32> to vector<16xf32>
    %52 = vector.shape_cast %51 : vector<16xf32> to vector<16x1xf32>
    %53 = vector.broadcast %52 : vector<16x1xf32> to vector<16x16xf32>
    %54 = arith.subf %50, %53 : vector<16x16xf32>
    %55 = math.exp %54 : vector<16x16xf32>
    %cst_17 = arith.constant dense<0.000000e+00> : vector<16xf32>
    %56 = vector.multi_reduction <add>, %55, %cst_17 [1] : vector<16x16xf32> to vector<16xf32>
    %57 = vector.shape_cast %56 : vector<16xf32> to vector<16x1xf32>
    %58 = vector.broadcast %57 : vector<16x1xf32> to vector<16x16xf32>
    %59 = arith.divf %55, %58 : vector<16x16xf32>
    %60 = vector.broadcast %44 : vector<1x32xf32> to vector<16x32xf32>
    %61 = arith.mulf %8, %60 : vector<16x32xf32>
    %cst_18 = arith.constant dense<0.000000e+00> : vector<16x32xf32>
    %62 = tpu.matmul %59, %61, %cst_18 {dimension_numbers = #tpu.dot_dimension_numbers<[1], [0], [0], [1], [0, 0, 1, 1], [], []>} : vector<16x16xf32>, vector<16x32xf32>, vector<16x32xf32> -> vector<16x32xf32>
    %63 = arith.addf %37, %62 : vector<16x32xf32>
    %c16_i32_19 = arith.constant 16 : i32
    %64 = vector.broadcast %c16_i32_19 : i32 to vector<1x32xi32>
    %65 = arith.cmpi sge, %10, %64 : vector<1x32xi32>
    %c24_i32 = arith.constant 24 : i32
    %66 = vector.broadcast %c24_i32 : i32 to vector<1x32xi32>
    %67 = arith.cmpi slt, %10, %66 : vector<1x32xi32>
    %68 = arith.andi %65, %67 : vector<1x32xi1>
    %69 = arith.extui %68 : vector<1x32xi1> to vector<1x32xi32>
    %70 = arith.sitofp %69 : vector<1x32xi32> to vector<1x32xf32>
    %71 = vector.broadcast %70 : vector<1x32xf32> to vector<16x32xf32>
    %72 = arith.mulf %6, %71 : vector<16x32xf32>
    %cst_20 = arith.constant dense<0.000000e+00> : vector<16x16xf32>
    %73 = tpu.matmul %72, %7, %cst_20 {dimension_numbers = #tpu.dot_dimension_numbers<[1], [1], [0], [0], [0, 0, 1, 0], [], []>} : vector<16x32xf32>, vector<16x32xf32>, vector<16x16xf32> -> vector<16x16xf32>
    %cst_21 = arith.constant 0.353553385 : f32
    %74 = vector.broadcast %cst_21 : f32 to vector<16x16xf32>
    %75 = arith.mulf %73, %74 : vector<16x16xf32>
    %76 = arith.addf %75, %9 : vector<16x16xf32>
    %cst_22 = arith.constant dense<0xFF800000> : vector<16xf32>
    %77 = vector.multi_reduction <maximumf>, %76, %cst_22 [1] : vector<16x16xf32> to vector<16xf32>
    %78 = vector.shape_cast %77 : vector<16xf32> to vector<16x1xf32>
    %79 = vector.broadcast %78 : vector<16x1xf32> to vector<16x16xf32>
    %80 = arith.subf %76, %79 : vector<16x16xf32>
    %81 = math.exp %80 : vector<16x16xf32>
    %cst_23 = arith.constant dense<0.000000e+00> : vector<16xf32>
    %82 = vector.multi_reduction <add>, %81, %cst_23 [1] : vector<16x16xf32> to vector<16xf32>
    %83 = vector.shape_cast %82 : vector<16xf32> to vector<16x1xf32>
    %84 = vector.broadcast %83 : vector<16x1xf32> to vector<16x16xf32>
    %85 = arith.divf %81, %84 : vector<16x16xf32>
    %86 = vector.broadcast %70 : vector<1x32xf32> to vector<16x32xf32>
    %87 = arith.mulf %8, %86 : vector<16x32xf32>
    %cst_24 = arith.constant dense<0.000000e+00> : vector<16x32xf32>
    %88 = tpu.matmul %85, %87, %cst_24 {dimension_numbers = #tpu.dot_dimension_numbers<[1], [0], [0], [1], [0, 0, 1, 1], [], []>} : vector<16x16xf32>, vector<16x32xf32>, vector<16x32xf32> -> vector<16x32xf32>
    %89 = arith.addf %63, %88 : vector<16x32xf32>
    %c24_i32_25 = arith.constant 24 : i32
    %90 = vector.broadcast %c24_i32_25 : i32 to vector<1x32xi32>
    %91 = arith.cmpi sge, %10, %90 : vector<1x32xi32>
    %c32_i32 = arith.constant 32 : i32
    %92 = vector.broadcast %c32_i32 : i32 to vector<1x32xi32>
    %93 = arith.cmpi slt, %10, %92 : vector<1x32xi32>
    %94 = arith.andi %91, %93 : vector<1x32xi1>
    %95 = arith.extui %94 : vector<1x32xi1> to vector<1x32xi32>
    %96 = arith.sitofp %95 : vector<1x32xi32> to vector<1x32xf32>
    %97 = vector.broadcast %96 : vector<1x32xf32> to vector<16x32xf32>
    %98 = arith.mulf %6, %97 : vector<16x32xf32>
    %cst_26 = arith.constant dense<0.000000e+00> : vector<16x16xf32>
    %99 = tpu.matmul %98, %7, %cst_26 {dimension_numbers = #tpu.dot_dimension_numbers<[1], [1], [0], [0], [0, 0, 1, 0], [], []>} : vector<16x32xf32>, vector<16x32xf32>, vector<16x16xf32> -> vector<16x16xf32>
    %cst_27 = arith.constant 0.353553385 : f32
    %100 = vector.broadcast %cst_27 : f32 to vector<16x16xf32>
    %101 = arith.mulf %99, %100 : vector<16x16xf32>
    %102 = arith.addf %101, %9 : vector<16x16xf32>
    %cst_28 = arith.constant dense<0xFF800000> : vector<16xf32>
    %103 = vector.multi_reduction <maximumf>, %102, %cst_28 [1] : vector<16x16xf32> to vector<16xf32>
    %104 = vector.shape_cast %103 : vector<16xf32> to vector<16x1xf32>
    %105 = vector.broadcast %104 : vector<16x1xf32> to vector<16x16xf32>
    %106 = arith.subf %102, %105 : vector<16x16xf32>
    %107 = math.exp %106 : vector<16x16xf32>
    %cst_29 = arith.constant dense<0.000000e+00> : vector<16xf32>
    %108 = vector.multi_reduction <add>, %107, %cst_29 [1] : vector<16x16xf32> to vector<16xf32>
    %109 = vector.shape_cast %108 : vector<16xf32> to vector<16x1xf32>
    %110 = vector.broadcast %109 : vector<16x1xf32> to vector<16x16xf32>
    %111 = arith.divf %107, %110 : vector<16x16xf32>
    %112 = vector.broadcast %96 : vector<1x32xf32> to vector<16x32xf32>
    %113 = arith.mulf %8, %112 : vector<16x32xf32>
    %cst_30 = arith.constant dense<0.000000e+00> : vector<16x32xf32>
    %114 = tpu.matmul %111, %113, %cst_30 {dimension_numbers = #tpu.dot_dimension_numbers<[1], [0], [0], [1], [0, 0, 1, 1], [], []>} : vector<16x16xf32>, vector<16x32xf32>, vector<16x32xf32> -> vector<16x32xf32>
    %115 = arith.addf %89, %114 : vector<16x32xf32>
    %c0_31 = arith.constant 0 : index
    %c0_32 = arith.constant 0 : index
    %116 = vector.load %arg5[%c0_31, %c0_32] : memref<32x32xf32, #tpu.memory_space<vmem>>, vector<32x32xf32>
    %cst_33 = arith.constant dense<0.000000e+00> : vector<16x32xf32>
    %117 = tpu.matmul %115, %116, %cst_33 {dimension_numbers = #tpu.dot_dimension_numbers<[1], [0], [0], [1], [0, 0, 1, 1], [], []>} : vector<16x32xf32>, vector<32x32xf32>, vector<16x32xf32> -> vector<16x32xf32>
    %c0_34 = arith.constant 0 : index
    %c0_35 = arith.constant 0 : index
    %118 = vector.load %arg6[%c0_34, %c0_35] : memref<1x32xf32, #tpu.memory_space<vmem>>, vector<1x32xf32>
    %119 = vector.broadcast %118 : vector<1x32xf32> to vector<16x32xf32>
    %120 = arith.addf %117, %119 : vector<16x32xf32>
    %121 = arith.addf %120, %0 : vector<16x32xf32>
    %c0_36 = arith.constant 0 : index
    %c0_37 = arith.constant 0 : index
    %122 = vector.load %arg7[%c0_36, %c0_37] : memref<1x32xf32, #tpu.memory_space<vmem>>, vector<1x32xf32>
    %c0_38 = arith.constant 0 : index
    %c0_39 = arith.constant 0 : index
    %123 = vector.load %arg8[%c0_38, %c0_39] : memref<1x32xf32, #tpu.memory_space<vmem>>, vector<1x32xf32>
    %cst_40 = arith.constant dense<0.000000e+00> : vector<16xf32>
    %124 = vector.multi_reduction <add>, %121, %cst_40 [1] : vector<16x32xf32> to vector<16xf32>
    %125 = vector.shape_cast %124 : vector<16xf32> to vector<16x1xf32>
    %cst_41 = arith.constant 3.200000e+01 : f32
    %126 = vector.broadcast %cst_41 : f32 to vector<16x1xf32>
    %127 = arith.divf %125, %126 : vector<16x1xf32>
    %128 = vector.broadcast %127 : vector<16x1xf32> to vector<16x32xf32>
    %129 = arith.subf %121, %128 : vector<16x32xf32>
    %130 = arith.mulf %129, %129 : vector<16x32xf32>
    %cst_42 = arith.constant dense<0.000000e+00> : vector<16xf32>
    %131 = vector.multi_reduction <add>, %130, %cst_42 [1] : vector<16x32xf32> to vector<16xf32>
    %132 = vector.shape_cast %131 : vector<16xf32> to vector<16x1xf32>
    %cst_43 = arith.constant 3.200000e+01 : f32
    %133 = vector.broadcast %cst_43 : f32 to vector<16x1xf32>
    %134 = arith.divf %132, %133 : vector<16x1xf32>
    %135 = vector.broadcast %127 : vector<16x1xf32> to vector<16x32xf32>
    %136 = arith.subf %121, %135 : vector<16x32xf32>
    %cst_44 = arith.constant 9.99999974E-6 : f32
    %137 = vector.broadcast %cst_44 : f32 to vector<16x1xf32>
    %138 = arith.addf %134, %137 : vector<16x1xf32>
    %139 = math.rsqrt %138 : vector<16x1xf32>
    %140 = vector.broadcast %139 : vector<16x1xf32> to vector<16x32xf32>
    %141 = arith.mulf %136, %140 : vector<16x32xf32>
    %142 = vector.broadcast %122 : vector<1x32xf32> to vector<16x32xf32>
    %143 = arith.mulf %142, %141 : vector<16x32xf32>
    %144 = vector.broadcast %123 : vector<1x32xf32> to vector<16x32xf32>
    %145 = arith.addf %143, %144 : vector<16x32xf32>
    %c0_45 = arith.constant 0 : index
    %c0_46 = arith.constant 0 : index
    %146 = vector.load %arg9[%c0_45, %c0_46] : memref<32x64xf32, #tpu.memory_space<vmem>>, vector<32x64xf32>
    %cst_47 = arith.constant dense<0.000000e+00> : vector<16x64xf32>
    %147 = tpu.matmul %145, %146, %cst_47 {dimension_numbers = #tpu.dot_dimension_numbers<[1], [0], [0], [1], [0, 0, 1, 1], [], []>} : vector<16x32xf32>, vector<32x64xf32>, vector<16x64xf32> -> vector<16x64xf32>
    %c0_48 = arith.constant 0 : index
    %c0_49 = arith.constant 0 : index
    %148 = vector.load %arg10[%c0_48, %c0_49] : memref<1x64xf32, #tpu.memory_space<vmem>>, vector<1x64xf32>
    %149 = vector.broadcast %148 : vector<1x64xf32> to vector<16x64xf32>
    %150 = arith.addf %147, %149 : vector<16x64xf32>
    %cst_50 = arith.constant 0.000000e+00 : f32
    %151 = vector.broadcast %cst_50 : f32 to vector<16x64xf32>
    %152 = arith.maximumf %150, %151 : vector<16x64xf32>
    %c0_51 = arith.constant 0 : index
    %c0_52 = arith.constant 0 : index
    %153 = vector.load %arg11[%c0_51, %c0_52] : memref<64x32xf32, #tpu.memory_space<vmem>>, vector<64x32xf32>
    %cst_53 = arith.constant dense<0.000000e+00> : vector<16x32xf32>
    %154 = tpu.matmul %152, %153, %cst_53 {dimension_numbers = #tpu.dot_dimension_numbers<[1], [0], [0], [1], [0, 0, 1, 1], [], []>} : vector<16x64xf32>, vector<64x32xf32>, vector<16x32xf32> -> vector<16x32xf32>
    %c0_54 = arith.constant 0 : index
    %c0_55 = arith.constant 0 : index
    %155 = vector.load %arg12[%c0_54, %c0_55] : memref<1x32xf32, #tpu.memory_space<vmem>>, vector<1x32xf32>
    %156 = vector.broadcast %155 : vector<1x32xf32> to vector<16x32xf32>
    %157 = arith.addf %154, %156 : vector<16x32xf32>
    %158 = arith.addf %157, %145 : vector<16x32xf32>
    %c0_56 = arith.constant 0 : index
    %c0_57 = arith.constant 0 : index
    %159 = vector.load %arg13[%c0_56, %c0_57] : memref<1x32xf32, #tpu.memory_space<vmem>>, vector<1x32xf32>
    %c0_58 = arith.constant 0 : index
    %c0_59 = arith.constant 0 : index
    %160 = vector.load %arg14[%c0_58, %c0_59] : memref<1x32xf32, #tpu.memory_space<vmem>>, vector<1x32xf32>
    %cst_60 = arith.constant dense<0.000000e+00> : vector<16xf32>
    %161 = vector.multi_reduction <add>, %158, %cst_60 [1] : vector<16x32xf32> to vector<16xf32>
    %162 = vector.shape_cast %161 : vector<16xf32> to vector<16x1xf32>
    %cst_61 = arith.constant 3.200000e+01 : f32
    %163 = vector.broadcast %cst_61 : f32 to vector<16x1xf32>
    %164 = arith.divf %162, %163 : vector<16x1xf32>
    %165 = vector.broadcast %164 : vector<16x1xf32> to vector<16x32xf32>
    %166 = arith.subf %158, %165 : vector<16x32xf32>
    %167 = arith.mulf %166, %166 : vector<16x32xf32>
    %cst_62 = arith.constant dense<0.000000e+00> : vector<16xf32>
    %168 = vector.multi_reduction <add>, %167, %cst_62 [1] : vector<16x32xf32> to vector<16xf32>
    %169 = vector.shape_cast %168 : vector<16xf32> to vector<16x1xf32>
    %cst_63 = arith.constant 3.200000e+01 : f32
    %170 = vector.broadcast %cst_63 : f32 to vector<16x1xf32>
    %171 = arith.divf %169, %170 : vector<16x1xf32>
    %172 = vector.broadcast %164 : vector<16x1xf32> to vector<16x32xf32>
    %173 = arith.subf %158, %172 : vector<16x32xf32>
    %cst_64 = arith.constant 9.99999974E-6 : f32
    %174 = vector.broadcast %cst_64 : f32 to vector<16x1xf32>
    %175 = arith.addf %171, %174 : vector<16x1xf32>
    %176 = math.rsqrt %175 : vector<16x1xf32>
    %177 = vector.broadcast %176 : vector<16x1xf32> to vector<16x32xf32>
    %178 = arith.mulf %173, %177 : vector<16x32xf32>
    %179 = vector.broadcast %159 : vector<1x32xf32> to vector<16x32xf32>
    %180 = arith.mulf %179, %178 : vector<16x32xf32>
    %181 = vector.broadcast %160 : vector<1x32xf32> to vector<16x32xf32>
    %182 = arith.addf %180, %181 : vector<16x32xf32>
    %c0_65 = arith.constant 0 : index
    %c0_66 = arith.constant 0 : index
    %183 = vector.load %arg15[%c0_65, %c0_66] : memref<16x32xf32, #tpu.memory_space<vmem>>, vector<16x32xf32>
    tpu.vector_store %arg15[%c0_65, %c0_66], %182 {strides = array<i32>} : memref<16x32xf32, #tpu.memory_space<vmem>>, vector<16x32xf32>,
    return
  }
  func.func @transform_0(%arg0: i32) -> (i32, i32) {
    %c0_i32 = arith.constant 0 : i32
    %c0_i32_0 = arith.constant 0 : i32
    %c0_i32_1 = arith.constant 0 : i32
    return %c0_i32, %c0_i32_0 : i32, i32
  }
  func.func @transform_1(%arg0: i32) -> (i32, i32) {
    %c0_i32 = arith.constant 0 : i32
    %c0_i32_0 = arith.constant 0 : i32
    %c0_i32_1 = arith.constant 0 : i32
    return %c0_i32, %c0_i32_0 : i32, i32
  }
  func.func @transform_2(%arg0: i32) -> (i32, i32) {
    %c0_i32 = arith.constant 0 : i32
    %c0_i32_0 = arith.constant 0 : i32
    %c0_i32_1 = arith.constant 0 : i32
    return %c0_i32, %c0_i32_0 : i32, i32
  }
  func.func @transform_3(%arg0: i32) -> (i32, i32) {
    %c0_i32 = arith.constant 0 : i32
    %c0_i32_0 = arith.constant 0 : i32
    %c0_i32_1 = arith.constant 0 : i32
    return %c0_i32, %c0_i32_0 : i32, i32
  }
  func.func @transform_4(%arg0: i32) -> (i32, i32) {
    %c0_i32 = arith.constant 0 : i32
    %c0_i32_0 = arith.constant 0 : i32
    %c0_i32_1 = arith.constant 0 : i32
    return %c0_i32, %c0_i32_0 : i32, i32
  }
  func.func @transform_5(%arg0: i32) -> (i32, i32) {
    %c0_i32 = arith.constant 0 : i32
    %c0_i32_0 = arith.constant 0 : i32
    %c0_i32_1 = arith.constant 0 : i32
    return %c0_i32, %c0_i32_0 : i32, i32
  }
  func.func @transform_6(%arg0: i32) -> (i32, i32) {
    %c0_i32 = arith.constant 0 : i32
    %c0_i32_0 = arith.constant 0 : i32
    %c0_i32_1 = arith.constant 0 : i32
    return %c0_i32, %c0_i32_0 : i32, i32
  }
  func.func @transform_7(%arg0: i32) -> (i32, i32) {
    %c0_i32 = arith.constant 0 : i32
    %c0_i32_0 = arith.constant 0 : i32
    %c0_i32_1 = arith.constant 0 : i32
    return %c0_i32, %c0_i32_0 : i32, i32
  }
  func.func @transform_8(%arg0: i32) -> (i32, i32) {
    %c0_i32 = arith.constant 0 : i32
    %c0_i32_0 = arith.constant 0 : i32
    %c0_i32_1 = arith.constant 0 : i32
    return %c0_i32, %c0_i32_0 : i32, i32
  }
  func.func @transform_9(%arg0: i32) -> (i32, i32) {
    %c0_i32 = arith.constant 0 : i32
    %c0_i32_0 = arith.constant 0 : i32
    %c0_i32_1 = arith.constant 0 : i32
    return %c0_i32, %c0_i32_0 : i32, i32
  }
  func.func @transform_10(%arg0: i32) -> (i32, i32) {
    %c0_i32 = arith.constant 0 : i32
    %c0_i32_0 = arith.constant 0 : i32
    %c0_i32_1 = arith.constant 0 : i32
    return %c0_i32, %c0_i32_0 : i32, i32
  }
  func.func @transform_11(%arg0: i32) -> (i32, i32) {
    %c0_i32 = arith.constant 0 : i32
    %c0_i32_0 = arith.constant 0 : i32
    %c0_i32_1 = arith.constant 0 : i32
    return %c0_i32, %c0_i32_0 : i32, i32
  }
  func.func @transform_12(%arg0: i32) -> (i32, i32) {
    %c0_i32 = arith.constant 0 : i32
    %c0_i32_0 = arith.constant 0 : i32
    %c0_i32_1 = arith.constant 0 : i32
    return %c0_i32, %c0_i32_0 : i32, i32
  }
  func.func @transform_13(%arg0: i32) -> (i32, i32) {
    %c0_i32 = arith.constant 0 : i32
    %c0_i32_0 = arith.constant 0 : i32
    %c0_i32_1 = arith.constant 0 : i32
    return %c0_i32, %c0_i32_0 : i32, i32
  }
  func.func @transform_14(%arg0: i32) -> (i32, i32) {
    %c0_i32 = arith.constant 0 : i32
    %c0_i32_0 = arith.constant 0 : i32
    %c0_i32_1 = arith.constant 0 : i32
    return %c0_i32, %c0_i32_0 : i32, i32
  }
}

</mosaic_0001>

<llo_original>
// kernel: tpu_custom_call.1
$region0: #{tpu_custom_call.1}
  #allocation0 [shape = 'u32[]', space=smem, size = 0x4, offset = 0x4, fixed_abs, tag = 'smem constant byte address 0x4 - core index']
  #allocation1 [shape = 'u32[144,128]{1,0:T(1,128)}', space=vmem, size = 0x12000, scoped, tag = 'internal scratch']
  %s0 = inlined_call_operand.hbm [shape: f32[16,32], index: 0, kind: input, shape index: {}]
  %s1 = inlined_call_operand.hbm [shape: f32[16,16], index: 1, kind: input, shape index: {}]
  %s2 = inlined_call_operand.vmem [shape: f32[32,96], index: 2, kind: input, shape index: {}]
  %s3 = inlined_call_operand.vmem [shape: f32[1,96], index: 3, kind: input, shape index: {}]
  %s4 = inlined_call_operand.vmem [shape: f32[32,32], index: 4, kind: input, shape index: {}]
  %s5 = inlined_call_operand.vmem [shape: f32[1,32], index: 5, kind: input, shape index: {}]
  %s6 = inlined_call_operand.vmem [shape: f32[1,32], index: 6, kind: input, shape index: {}]
  %s7 = inlined_call_operand.vmem [shape: f32[1,32], index: 7, kind: input, shape index: {}]
  %s8 = inlined_call_operand.vmem [shape: f32[32,64], index: 8, kind: input, shape index: {}]
  %s9 = inlined_call_operand.vmem [shape: f32[1,64], index: 9, kind: input, shape index: {}]
  %s10 = inlined_call_operand.vmem [shape: f32[64,32], index: 10, kind: input, shape index: {}]
  %s11 = inlined_call_operand.vmem [shape: f32[1,32], index: 11, kind: input, shape index: {}]
  %s12 = inlined_call_operand.vmem [shape: f32[1,32], index: 12, kind: input, shape index: {}]
  %s13 = inlined_call_operand.vmem [shape: f32[1,32], index: 13, kind: input, shape index: {}]
  %s14 = inlined_call_operand.hbm [shape: f32[16,32], index: 14, kind: output, shape index: {}]
  %s15 = sld [smem:[#allocation0]]
  $region74: #{tpu_custom_call.1} parent=0
    _
  %s17 = ssub.s32 1, %s15
  %s18 = scalar_select 0, %s17, %s15
  $region1: #{tpu_custom_call.1} parent=0
    #allocation2 [shape = 'u8[8192]{0}', space=vmem, size = 0x2000, scoped, tag = 'input window, operand 0, single buffered']
    #allocation3 [shape = 's32[1]{0}', space=sflag, size = 0x4, scoped, tag = 'scoped memory for tpu_custom_call.1']
    #allocation4 [shape = 's32[1]{0}', space=sflag, size = 0x4, scoped, tag = 'scoped memory for tpu_custom_call.1']
    #allocation5 [shape = 'u8[8192]{0}', space=vmem, size = 0x2000, scoped, tag = 'input window, operand 1, single buffered']
    #allocation6 [shape = 's32[1]{0}', space=sflag, size = 0x4, scoped, tag = 'scoped memory for tpu_custom_call.1']
    #allocation7 [shape = 'u8[8192]{0}', space=vmem, size = 0x2000, scoped, tag = 'output window, operand 0, single buffered']
    %19 = vsyncpa [#allocation3], 0
    %20 = vsyncpa [#allocation6], 0
    %21 = vsyncpa [#allocation4], 0
    // Predicated region
    $region2: #{tpu_custom_call.1} parent=1 // pred_check
      _
    $region3: #{tpu_custom_call.1} parent=1 // pred_check_branch
      %23 = sbr.rel (0) target = $region5
    $region4: #{tpu_custom_call.1} parent=1 // pred_region
      %s25 = ssub.s32 256, 256
      %26 = vsyncadd [#allocation3], %s25
      %s27 = sshll.u32 [#allocation2], 4
      %s28 = int_to_ptr.vmem [resolvable:$true] %s27
      %33 = dma.hbm_to_vmem [thread:$0]  %s0, 256, %s28, [#allocation3], 128, 128, 8
    $region5: #{tpu_custom_call.1} parent=1 // pred_fallthru
      _
    // Predicated region
    $region6: #{tpu_custom_call.1} parent=1 // pred_check
      _
    $region7: #{tpu_custom_call.1} parent=1 // pred_check_branch
      %35 = sbr.rel (0) target = $region9
    $region8: #{tpu_custom_call.1} parent=1 // pred_region
      %s37 = ssub.s32 256, 256
      %38 = vsyncadd [#allocation6], %s37
      %s39 = sshll.u32 [#allocation5], 4
      %s40 = int_to_ptr.vmem [resolvable:$true] %s39
      %45 = dma.hbm_to_vmem [thread:$0]  %s1, 256, %s40, [#allocation6], 128, 128, 8
    $region9: #{tpu_custom_call.1} parent=1 // pred_fallthru
      _
    // Predicated region
    $region10: #{tpu_custom_call.1} parent=1 // pred_check
      _
    $region11: #{tpu_custom_call.1} parent=1 // pred_check_branch
      %47 = sbr.rel (0) target = $region13
    $region12: #{tpu_custom_call.1} parent=1 // pred_region
      _
    $region13: #{tpu_custom_call.1} parent=1 // pred_fallthru
      _
    // Predicated region
    $region14: #{tpu_custom_call.1} parent=1 // pred_check
      _
    $region15: #{tpu_custom_call.1} parent=1 // pred_check_branch
      %49 = sbr.rel (0) target = $region17
    $region16: #{tpu_custom_call.1} parent=1 // pred_region
      _
    $region17: #{tpu_custom_call.1} parent=1 // pred_fallthru
      _
    // Predicated region
    $region18: #{tpu_custom_call.1} parent=1 // pred_check
      _
    $region19: #{tpu_custom_call.1} parent=1 // pred_check_branch
      %51 = sbr.rel (0) target = $region21
    $region20: #{tpu_custom_call.1} parent=1 // pred_region
      _
    $region21: #{tpu_custom_call.1} parent=1 // pred_fallthru
      _
    // Predicated region
    $region22: #{tpu_custom_call.1} parent=1 // pred_check
      _
    $region23: #{tpu_custom_call.1} parent=1 // pred_check_branch
      %53 = sbr.rel (0) target = $region25
    $region24: #{tpu_custom_call.1} parent=1 // pred_region
      _
    $region25: #{tpu_custom_call.1} parent=1 // pred_fallthru
      _
    // Predicated region
    $region26: #{tpu_custom_call.1} parent=1 // pred_check
      _
    $region27: #{tpu_custom_call.1} parent=1 // pred_check_branch
      %55 = sbr.rel (0) target = $region29
    $region28: #{tpu_custom_call.1} parent=1 // pred_region
      _
    $region29: #{tpu_custom_call.1} parent=1 // pred_fallthru
      _
    // Predicated region
    $region30: #{tpu_custom_call.1} parent=1 // pred_check
      _
    $region31: #{tpu_custom_call.1} parent=1 // pred_check_branch
      %57 = sbr.rel (0) target = $region33
    $region32: #{tpu_custom_call.1} parent=1 // pred_region
      _
    $region33: #{tpu_custom_call.1} parent=1 // pred_fallthru
      _
    // Predicated region
    $region34: #{tpu_custom_call.1} parent=1 // pred_check
      _
    $region35: #{tpu_custom_call.1} parent=1 // pred_check_branch
      %59 = sbr.rel (0) target = $region37
    $region36: #{tpu_custom_call.1} parent=1 // pred_region
      _
    $region37: #{tpu_custom_call.1} parent=1 // pred_fallthru
      _
    // Predicated region
    $region38: #{tpu_custom_call.1} parent=1 // pred_check
      _
    $region39: #{tpu_custom_call.1} parent=1 // pred_check_branch
      %61 = sbr.rel (0) target = $region41
    $region40: #{tpu_custom_call.1} parent=1 // pred_region
      _
    $region41: #{tpu_custom_call.1} parent=1 // pred_fallthru
      _
    // Predicated region
    $region42: #{tpu_custom_call.1} parent=1 // pred_check
      _
    $region43: #{tpu_custom_call.1} parent=1 // pred_check_branch
      %63 = sbr.rel (0) target = $region45
    $region44: #{tpu_custom_call.1} parent=1 // pred_region
      _
    $region45: #{tpu_custom_call.1} parent=1 // pred_fallthru
      _
    // Predicated region
    $region46: #{tpu_custom_call.1} parent=1 // pred_check
      _
    $region47: #{tpu_custom_call.1} parent=1 // pred_check_branch
      %65 = sbr.rel (0) target = $region49
    $region48: #{tpu_custom_call.1} parent=1 // pred_region
      _
    $region49: #{tpu_custom_call.1} parent=1 // pred_fallthru
      _
    // Predicated region
    $region50: #{tpu_custom_call.1} parent=1 // pred_check
      _
    $region51: #{tpu_custom_call.1} parent=1 // pred_check_branch
      %67 = sbr.rel (0) target = $region53
    $region52: #{tpu_custom_call.1} parent=1 // pred_region
      _
    $region53: #{tpu_custom_call.1} parent=1 // pred_fallthru
      _
    // Predicated region
    $region54: #{tpu_custom_call.1} parent=1 // pred_check
      _
    $region55: #{tpu_custom_call.1} parent=1 // pred_check_branch
      %69 = sbr.rel (0) target = $region57
    $region56: #{tpu_custom_call.1} parent=1 // pred_region
      _
    $region57: #{tpu_custom_call.1} parent=1 // pred_fallthru
      _
    // Predicated region
    $region58: #{tpu_custom_call.1} parent=1 // pred_check
      _
    $region59: #{tpu_custom_call.1} parent=1 // pred_check_branch
      %71 = sbr.rel (0) target = $region61
    $region60: #{tpu_custom_call.1} parent=1 // pred_region
      %72 = dma.done [#allocation3], 256
    $region61: #{tpu_custom_call.1} parent=1 // pred_fallthru
      _
    // Predicated region
    $region62: #{tpu_custom_call.1} parent=1 // pred_check
      _
    $region63: #{tpu_custom_call.1} parent=1 // pred_check_branch
      %74 = sbr.rel (0) target = $region65
    $region64: #{tpu_custom_call.1} parent=1 // pred_region
      %75 = dma.done [#allocation6], 256
    $region65: #{tpu_custom_call.1} parent=1 // pred_fallthru
      _
    %v76 = vld [vmem:[#allocation2] sm:$0xff]
    %v77 = vld [vmem:[#allocation2 + $0x8] sm:$0xff]
    %v78 = vld [vmem:[%s2] sm:$0xff]
    %v79 = vld [vmem:[%s2 + $0x8] sm:$0xff]
    %v80 = vld [vmem:[%s2 + $0x10] sm:$0xff]
    %v81 = vld [vmem:[%s2 + $0x18] sm:$0xff]
    %v82 = vld [vmem:[%s3] sm:$0x1]
    %v84 = vlaneseq
    %v85 = vshrl.u32 %v84, 7
    %v86 = vsub.s32 0, %v85
    %v87 = vrot.slane %v82, %v86
    %vm89 = vcmask 261120
    %v91 = vsel %vm89, %v76, 0
    %v94 = vsel %vm89, %v77, 0
    %96 = vmatprep.subr.mxu0 0.0
    %97 = vmatpush1.msra.mxu0 0.0
    %98 = vmatprep.subr.mxu0 0.0
    %99 = vmatpush1.msra.mxu0 0.0
    %100 = vmatprep.subr.mxu0 0.0
    %101 = vmatpush1.msra.mxu0 0.0
    %102 = vmatprep.subr.mxu0 0.0
    %103 = vmatpush1.msra.mxu0 0.0
    %104 = vmatprep.subr.mxu0 0.0
    %105 = vmatpush1.msra.mxu0 0.0
    %106 = vmatprep.subr.mxu0 0.0
    %107 = vmatpush1.msra.mxu0 0.0
    %108 = vmatprep.subr.mxu0 0.0
    %109 = vmatpush1.msra.mxu0 0.0
    %110 = vmatprep.subr.mxu0 0.0
    %111 = vmatpush1.msra.mxu0 0.0
    %112 = vmatprep.subr.mxu0 0.0
    %113 = vmatpush1.msra.mxu0 0.0
    %114 = vmatprep.subr.mxu0 0.0
    %115 = vmatpush1.msra.mxu0 0.0
    %116 = vmatprep.subr.mxu0 0.0
    %117 = vmatpush1.msra.mxu0 0.0
    %118 = vmatprep.subr.mxu0 0.0
    %119 = vmatpush1.msra.mxu0 0.0
    %120 = vmatprep.subr.mxu0 0.0
    %121 = vmatpush1.msra.mxu0 %v81
    %122 = vmatprep.subr.mxu0 0.0
    %123 = vmatpush1.msra.mxu0 %v80
    %124 = vmatprep.subr.mxu0 0.0
    %125 = vmatpush1.msra.mxu0 %v79
    %126 = vmatprep.subr.mxu0 0.0
    %127 = vmatpush1.msra.mxu0 %v78
    %128 = vmatprep.subr.mxu0 0.0
    %129 = vmatpush2.msra.mxu0 0.0
    %130 = vmatprep.subr.mxu0 0.0
    %131 = vmatpush2.msra.mxu0 0.0
    %132 = vmatprep.subr.mxu0 0.0
    %133 = vmatpush2.msra.mxu0 0.0
    %134 = vmatprep.subr.mxu0 0.0
    %135 = vmatpush2.msra.mxu0 0.0
    %136 = vmatprep.subr.mxu0 0.0
    %137 = vmatpush2.msra.mxu0 0.0
    %138 = vmatprep.subr.mxu0 0.0
    %139 = vmatpush2.msra.mxu0 0.0
    %140 = vmatprep.subr.mxu0 0.0
    %141 = vmatpush2.msra.mxu0 0.0
    %142 = vmatprep.subr.mxu0 0.0
    %143 = vmatpush2.msra.mxu0 0.0
    %144 = vmatprep.subr.mxu0 0.0
    %145 = vmatpush2.msra.mxu0 0.0
    %146 = vmatprep.subr.mxu0 0.0
    %147 = vmatpush2.msra.mxu0 0.0
    %148 = vmatprep.subr.mxu0 0.0
    %149 = vmatpush2.msra.mxu0 0.0
    %150 = vmatprep.subr.mxu0 0.0
    %151 = vmatpush2.msra.mxu0 0.0
    %152 = vmatprep.subr.mxu0 0.0
    %153 = vmatpush2.msra.mxu0 0.0
    %154 = vmatprep.subr.mxu0 0.0
    %155 = vmatpush2.msra.mxu0 0.0
    %156 = vmatprep.subr.mxu0 0.0
    %157 = vmatpush2.msra.mxu0 0.0
    %158 = vmatprep.subr.mxu0 0.0
    %159 = vmatpush2.msra.mxu0 0.0
    %160 = vmatprep.mubr.f32.mxu0 0.0
    %161 = vmatmul.mubr.f32.gmra.mxu0 %v91
    %v162 = vpop.f32.mrf.mxu0
    %v163 = vadd.f32 %v87, %v162
    %v164 = vpop.f32.mrf.mxu0
    %165 = vmatprep.mubr.f32.mxu0 0.0
    %166 = vmatmul.mubr.f32.gmra.mxu0 %v94
    %v167 = vpop.f32.mrf.mxu0
    %v168 = vadd.f32 %v87, %v167
    %v169 = vpop.f32.mrf.mxu0
    %170 = vdwg.mxu0
    %v171 = vld [vmem:[#allocation5] sm:$0xff]
    %v172 = vld [vmem:[#allocation5 + $0x8] sm:$0xff]
    %v173 = vlaneseq
    %v174 = vand.u32 %v173, 127
    %vm175 = vcmp.ge.s32.totalorder %v174, 0
    %vm176 = vcmp.lt.s32.totalorder %v174, 8
    %vm177 = vmand %vm175, %vm176
    %v178 = vsel %vm177, 1, 0
    %v179 = vcvt.s32.f32 %v178
    %v180 = vmul.f32 %v163, %v179
    %v181 = vmul.f32 %v168, %v179
    %184 = vrot.lane.b32.xlu0 %v163, 96
    %v185 = vpop.permute.xlu0 %184
    %186 = vrot.lane.b32.xlu0 %v168, 96
    %v187 = vpop.permute.xlu0 %186
    %v189 = vsel %vm89, %v180, 0
    %v192 = vsel %vm89, %v181, 0
    %v194 = vsel %vm89, %v185, 0
    %v196 = vsel %vm89, %v187, 0
    %198 = vmatprep.subr.mxu0 0.0
    %199 = vmatpush1.xpose.msra.mxu0 0.0
    %200 = vmatprep.subr.mxu0 0.0
    %201 = vmatpush1.xpose.msra.mxu0 0.0
    %202 = vmatprep.subr.mxu0 0.0
    %203 = vmatpush1.xpose.msra.mxu0 0.0
    %204 = vmatprep.subr.mxu0 0.0
    %205 = vmatpush1.xpose.msra.mxu0 0.0
    %206 = vmatprep.subr.mxu0 0.0
    %207 = vmatpush1.xpose.msra.mxu0 0.0
    %208 = vmatprep.subr.mxu0 0.0
    %209 = vmatpush1.xpose.msra.mxu0 0.0
    %210 = vmatprep.subr.mxu0 0.0
    %211 = vmatpush1.xpose.msra.mxu0 0.0
    %212 = vmatprep.subr.mxu0 0.0
    %213 = vmatpush1.xpose.msra.mxu0 0.0
    %214 = vmatprep.subr.mxu0 0.0
    %215 = vmatpush1.xpose.msra.mxu0 0.0
    %216 = vmatprep.subr.mxu0 0.0
    %217 = vmatpush1.xpose.msra.mxu0 0.0
    %218 = vmatprep.subr.mxu0 0.0
    %219 = vmatpush1.xpose.msra.mxu0 0.0
    %220 = vmatprep.subr.mxu0 0.0
    %221 = vmatpush1.xpose.msra.mxu0 0.0
    %222 = vmatprep.subr.mxu0 0.0
    %223 = vmatpush1.xpose.msra.mxu0 0.0
    %224 = vmatprep.subr.mxu0 0.0
    %225 = vmatpush1.xpose.msra.mxu0 0.0
    %226 = vmatprep.subr.mxu0 0.0
    %227 = vmatpush1.xpose.msra.mxu0 %v196
    %228 = vmatprep.subr.mxu0 0.0
    %229 = vmatpush1.xpose.msra.mxu0 %v194
    %230 = vmatprep.subr.mxu0 0.0
    %231 = vmatpush2.xpose.msra.mxu0 0.0
    %232 = vmatprep.subr.mxu0 0.0
    %233 = vmatpush2.xpose.msra.mxu0 0.0
    %234 = vmatprep.subr.mxu0 0.0
    %235 = vmatpush2.xpose.msra.mxu0 0.0
    %236 = vmatprep.subr.mxu0 0.0
    %237 = vmatpush2.xpose.msra.mxu0 0.0
    %238 = vmatprep.subr.mxu0 0.0
    %239 = vmatpush2.xpose.msra.mxu0 0.0
    %240 = vmatprep.subr.mxu0 0.0
    %241 = vmatpush2.xpose.msra.mxu0 0.0
    %242 = vmatprep.subr.mxu0 0.0
    %243 = vmatpush2.xpose.msra.mxu0 0.0
    %244 = vmatprep.subr.mxu0 0.0
    %245 = vmatpush2.xpose.msra.mxu0 0.0
    %246 = vmatprep.subr.mxu0 0.0
    %247 = vmatpush2.xpose.msra.mxu0 0.0
    %248 = vmatprep.subr.mxu0 0.0
    %249 = vmatpush2.xpose.msra.mxu0 0.0
    %250 = vmatprep.subr.mxu0 0.0
    %251 = vmatpush2.xpose.msra.mxu0 0.0
    %252 = vmatprep.subr.mxu0 0.0
    %253 = vmatpush2.xpose.msra.mxu0 0.0
    %254 = vmatprep.subr.mxu0 0.0
    %255 = vmatpush2.xpose.msra.mxu0 0.0
    %256 = vmatprep.subr.mxu0 0.0
    %257 = vmatpush2.xpose.msra.mxu0 0.0
    %258 = vmatprep.subr.mxu0 0.0
    %259 = vmatpush2.xpose.msra.mxu0 0.0
    %260 = vmatprep.subr.mxu0 0.0
    %261 = vmatpush2.xpose.msra.mxu0 0.0
    %262 = vmatprep.mubr.f32.mxu0 0.0
    %263 = vmatmul.mubr.f32.gmra.mxu0 %v189
    %v264 = vpop.f32.mrf.mxu0
    %v265 = vadd.f32 0.0, %v264
    %v266 = vpop.f32.mrf.mxu0
    %267 = vmatprep.mubr.f32.mxu0 0.0
    %268 = vmatmul.mubr.f32.gmra.mxu0 %v192
    %v269 = vpop.f32.mrf.mxu0
    %v270 = vadd.f32 0.0, %v269
    %v271 = vpop.f32.mrf.mxu0
    %272 = vdwg.mxu0
    %v273 = vmul.f32 %v265, 0.35355338
    %v274 = vmul.f32 %v270, 0.35355338
    %v275 = vadd.f32 %v273, %v171
    %v276 = vadd.f32 %v274, %v172
    %vm277 = vcmask 130048
    %v278 = vsel %vm277, %v275, -inf
    %279 = vmax.xlane.f32.xlu0 %v278
    %v280 = vpop.xlane.xlu0 %279
    %v281 = vsel %vm277, %v276, -inf
    %282 = vmax.xlane.f32.xlu0 %v281
    %v283 = vpop.xlane.xlu0 %282
    %v284 = vsub.f32 %v275, %v280
    %v285 = vsub.f32 %v276, %v283
    %v286 = vmul.f32 %v284, 1.442695
    %v287 = vpow.pop %v286
    %v288 = vmul.f32 %v285, 1.442695
    %v289 = vpow.pop %v288
    %v290 = vsel %vm277, %v287, 0.0
    %291 = vadd.xlane.f32.xlu0 %v290
    %v292 = vpop.xlane.xlu0 %291
    %v293 = vsel %vm277, %v289, 0.0
    %294 = vadd.xlane.f32.xlu0 %v293
    %v295 = vpop.xlane.xlu0 %294
    %v296 = vrcp.pop %v292
    %v297 = vmul.f32 %v287, %v296
    %v298 = vrcp.pop %v295
    %v299 = vmul.f32 %v289, %v298
    %301 = vrot.lane.b32.xlu0 %v179, 64
    %v302 = vpop.permute.xlu0 %301
    %v304 = vmul.f32 %v163, %v302
    %v305 = vmul.f32 %v168, %v302
    %vm306 = vcmp.ge.s32.totalorder %v174, 8
    %vm307 = vcmp.lt.s32.totalorder %v174, 16
    %vm308 = vmand %vm306, %vm307
    %v309 = vsel %vm308, 1, 0
    %v310 = vcvt.s32.f32 %v309
    %v311 = vmul.f32 %v163, %v310
    %v312 = vmul.f32 %v168, %v310
    %v314 = vsel %vm89, %v311, 0
    %v317 = vsel %vm89, %v312, 0
    %319 = vmatprep.subr.mxu0 0.0
    %320 = vmatpush1.xpose.msra.mxu0 0.0
    %321 = vmatprep.subr.mxu0 0.0
    %322 = vmatpush1.xpose.msra.mxu0 0.0
    %323 = vmatprep.subr.mxu0 0.0
    %324 = vmatpush1.xpose.msra.mxu0 0.0
    %325 = vmatprep.subr.mxu0 0.0
    %326 = vmatpush1.xpose.msra.mxu0 0.0
    %327 = vmatprep.subr.mxu0 0.0
    %328 = vmatpush1.xpose.msra.mxu0 0.0
    %329 = vmatprep.subr.mxu0 0.0
    %330 = vmatpush1.xpose.msra.mxu0 0.0
    %331 = vmatprep.subr.mxu0 0.0
    %332 = vmatpush1.xpose.msra.mxu0 0.0
    %333 = vmatprep.subr.mxu0 0.0
    %334 = vmatpush1.xpose.msra.mxu0 0.0
    %335 = vmatprep.subr.mxu0 0.0
    %336 = vmatpush1.xpose.msra.mxu0 0.0
    %337 = vmatprep.subr.mxu0 0.0
    %338 = vmatpush1.xpose.msra.mxu0 0.0
    %339 = vmatprep.subr.mxu0 0.0
    %340 = vmatpush1.xpose.msra.mxu0 0.0
    %341 = vmatprep.subr.mxu0 0.0
    %342 = vmatpush1.xpose.msra.mxu0 0.0
    %343 = vmatprep.subr.mxu0 0.0
    %344 = vmatpush1.xpose.msra.mxu0 0.0
    %345 = vmatprep.subr.mxu0 0.0
    %346 = vmatpush1.xpose.msra.mxu0 0.0
    %347 = vmatprep.subr.mxu0 0.0
    %348 = vmatpush1.xpose.msra.mxu0 %v196
    %349 = vmatprep.subr.mxu0 0.0
    %350 = vmatpush1.xpose.msra.mxu0 %v194
    %351 = vmatprep.subr.mxu0 0.0
    %352 = vmatpush2.xpose.msra.mxu0 0.0
    %353 = vmatprep.subr.mxu0 0.0
    %354 = vmatpush2.xpose.msra.mxu0 0.0
    %355 = vmatprep.subr.mxu0 0.0
    %356 = vmatpush2.xpose.msra.mxu0 0.0
    %357 = vmatprep.subr.mxu0 0.0
    %358 = vmatpush2.xpose.msra.mxu0 0.0
    %359 = vmatprep.subr.mxu0 0.0
    %360 = vmatpush2.xpose.msra.mxu0 0.0
    %361 = vmatprep.subr.mxu0 0.0
    %362 = vmatpush2.xpose.msra.mxu0 0.0
    %363 = vmatprep.subr.mxu0 0.0
    %364 = vmatpush2.xpose.msra.mxu0 0.0
    %365 = vmatprep.subr.mxu0 0.0
    %366 = vmatpush2.xpose.msra.mxu0 0.0
    %367 = vmatprep.subr.mxu0 0.0
    %368 = vmatpush2.xpose.msra.mxu0 0.0
    %369 = vmatprep.subr.mxu0 0.0
    %370 = vmatpush2.xpose.msra.mxu0 0.0
    %371 = vmatprep.subr.mxu0 0.0
    %372 = vmatpush2.xpose.msra.mxu0 0.0
    %373 = vmatprep.subr.mxu0 0.0
    %374 = vmatpush2.xpose.msra.mxu0 0.0
    %375 = vmatprep.subr.mxu0 0.0
    %376 = vmatpush2.xpose.msra.mxu0 0.0
    %377 = vmatprep.subr.mxu0 0.0
    %378 = vmatpush2.xpose.msra.mxu0 0.0
    %379 = vmatprep.subr.mxu0 0.0
    %380 = vmatpush2.xpose.msra.mxu0 0.0
    %381 = vmatprep.subr.mxu0 0.0
    %382 = vmatpush2.xpose.msra.mxu0 0.0
    %383 = vmatprep.mubr.f32.mxu0 0.0
    %384 = vmatmul.mubr.f32.gmra.mxu0 %v314
    %v385 = vpop.f32.mrf.mxu0
    %v386 = vadd.f32 0.0, %v385
    %v387 = vpop.f32.mrf.mxu0
    %388 = vmatprep.mubr.f32.mxu0 0.0
    %389 = vmatmul.mubr.f32.gmra.mxu0 %v317
    %v390 = vpop.f32.mrf.mxu0
    %v391 = vadd.f32 0.0, %v390
    %v392 = vpop.f32.mrf.mxu0
    %393 = vdwg.mxu0
    %v394 = vmul.f32 %v386, 0.35355338
    %v395 = vmul.f32 %v391, 0.35355338
    %v396 = vadd.f32 %v394, %v171
    %v397 = vadd.f32 %v395, %v172
    %v398 = vsel %vm277, %v396, -inf
    %399 = vmax.xlane.f32.xlu0 %v398
    %v400 = vpop.xlane.xlu0 %399
    %v401 = vsel %vm277, %v397, -inf
    %402 = vmax.xlane.f32.xlu0 %v401
    %v403 = vpop.xlane.xlu0 %402
    %v404 = vsub.f32 %v396, %v400
    %v405 = vsub.f32 %v397, %v403
    %v406 = vmul.f32 %v404, 1.442695
    %v407 = vpow.pop %v406
    %v408 = vmul.f32 %v405, 1.442695
    %v409 = vpow.pop %v408
    %v410 = vsel %vm277, %v407, 0.0
    %411 = vadd.xlane.f32.xlu0 %v410
    %v412 = vpop.xlane.xlu0 %411
    %v413 = vsel %vm277, %v409, 0.0
    %414 = vadd.xlane.f32.xlu0 %v413
    %v415 = vpop.xlane.xlu0 %414
    %v416 = vrcp.pop %v412
    %v417 = vmul.f32 %v407, %v416
    %v418 = vrcp.pop %v415
    %v419 = vmul.f32 %v409, %v418
    %421 = vrot.lane.b32.xlu0 %v310, 64
    %v422 = vpop.permute.xlu0 %421
    %v424 = vmul.f32 %v163, %v422
    %v425 = vmul.f32 %v168, %v422
    %428 = vrot.lane.b32.xlu0 %v424, 64
    %v429 = vpop.permute.xlu0 %428
    %430 = vrot.lane.b32.xlu0 %v425, 64
    %v431 = vpop.permute.xlu0 %430
    %v435 = vsel %vm277, %v417, 0
    %v438 = vsel %vm277, %v419, 0
    %440 = vmatprep.subr.mxu0 0.0
    %441 = vmatpush1.msra.mxu0 0.0
    %442 = vmatprep.subr.mxu0 0.0
    %443 = vmatpush1.msra.mxu0 0.0
    %444 = vmatprep.subr.mxu0 0.0
    %445 = vmatpush1.msra.mxu0 0.0
    %446 = vmatprep.subr.mxu0 0.0
    %447 = vmatpush1.msra.mxu0 0.0
    %448 = vmatprep.subr.mxu0 0.0
    %449 = vmatpush1.msra.mxu0 0.0
    %450 = vmatprep.subr.mxu0 0.0
    %451 = vmatpush1.msra.mxu0 0.0
    %452 = vmatprep.subr.mxu0 0.0
    %453 = vmatpush1.msra.mxu0 0.0
    %454 = vmatprep.subr.mxu0 0.0
    %455 = vmatpush1.msra.mxu0 0.0
    %456 = vmatprep.subr.mxu0 0.0
    %457 = vmatpush1.msra.mxu0 0.0
    %458 = vmatprep.subr.mxu0 0.0
    %459 = vmatpush1.msra.mxu0 0.0
    %460 = vmatprep.subr.mxu0 0.0
    %461 = vmatpush1.msra.mxu0 0.0
    %462 = vmatprep.subr.mxu0 0.0
    %463 = vmatpush1.msra.mxu0 0.0
    %464 = vmatprep.subr.mxu0 0.0
    %465 = vmatpush1.msra.mxu0 0.0
    %466 = vmatprep.subr.mxu0 0.0
    %467 = vmatpush1.msra.mxu0 0.0
    %468 = vmatprep.subr.mxu0 0.0
    %469 = vmatpush1.msra.mxu0 %v431
    %470 = vmatprep.subr.mxu0 0.0
    %471 = vmatpush1.msra.mxu0 %v429
    %472 = vmatprep.subr.mxu0 0.0
    %473 = vmatpush2.msra.mxu0 0.0
    %474 = vmatprep.subr.mxu0 0.0
    %475 = vmatpush2.msra.mxu0 0.0
    %476 = vmatprep.subr.mxu0 0.0
    %477 = vmatpush2.msra.mxu0 0.0
    %478 = vmatprep.subr.mxu0 0.0
    %479 = vmatpush2.msra.mxu0 0.0
    %480 = vmatprep.subr.mxu0 0.0
    %481 = vmatpush2.msra.mxu0 0.0
    %482 = vmatprep.subr.mxu0 0.0
    %483 = vmatpush2.msra.mxu0 0.0
    %484 = vmatprep.subr.mxu0 0.0
    %485 = vmatpush2.msra.mxu0 0.0
    %486 = vmatprep.subr.mxu0 0.0
    %487 = vmatpush2.msra.mxu0 0.0
    %488 = vmatprep.subr.mxu0 0.0
    %489 = vmatpush2.msra.mxu0 0.0
    %490 = vmatprep.subr.mxu0 0.0
    %491 = vmatpush2.msra.mxu0 0.0
    %492 = vmatprep.subr.mxu0 0.0
    %493 = vmatpush2.msra.mxu0 0.0
    %494 = vmatprep.subr.mxu0 0.0
    %495 = vmatpush2.msra.mxu0 0.0
    %496 = vmatprep.subr.mxu0 0.0
    %497 = vmatpush2.msra.mxu0 0.0
    %498 = vmatprep.subr.mxu0 0.0
    %499 = vmatpush2.msra.mxu0 0.0
    %500 = vmatprep.subr.mxu0 0.0
    %501 = vmatpush2.msra.mxu0 0.0
    %502 = vmatprep.subr.mxu0 0.0
    %503 = vmatpush2.msra.mxu0 0.0
    %504 = vmatprep.mubr.f32.mxu0 0.0
    %505 = vmatmul.mubr.f32.gmra.mxu0 %v435
    %v506 = vpop.f32.mrf.mxu0
    %v507 = vadd.f32 0.0, %v506
    %v508 = vpop.f32.mrf.mxu0
    %509 = vmatprep.mubr.f32.mxu0 0.0
    %510 = vmatmul.mubr.f32.gmra.mxu0 %v438
    %v511 = vpop.f32.mrf.mxu0
    %v512 = vadd.f32 0.0, %v511
    %v513 = vpop.f32.mrf.mxu0
    %514 = vdwg.mxu0
    %517 = vrot.lane.b32.xlu0 %v304, 64
    %v518 = vpop.permute.xlu0 %517
    %519 = vrot.lane.b32.xlu0 %v305, 64
    %v520 = vpop.permute.xlu0 %519
    %v524 = vsel %vm277, %v297, 0
    %v527 = vsel %vm277, %v299, 0
    %529 = vmatprep.subr.mxu0 0.0
    %530 = vmatpush1.msra.mxu0 0.0
    %531 = vmatprep.subr.mxu0 0.0
    %532 = vmatpush1.msra.mxu0 0.0
    %533 = vmatprep.subr.mxu0 0.0
    %534 = vmatpush1.msra.mxu0 0.0
    %535 = vmatprep.subr.mxu0 0.0
    %536 = vmatpush1.msra.mxu0 0.0
    %537 = vmatprep.subr.mxu0 0.0
    %538 = vmatpush1.msra.mxu0 0.0
    %539 = vmatprep.subr.mxu0 0.0
    %540 = vmatpush1.msra.mxu0 0.0
    %541 = vmatprep.subr.mxu0 0.0
    %542 = vmatpush1.msra.mxu0 0.0
    %543 = vmatprep.subr.mxu0 0.0
    %544 = vmatpush1.msra.mxu0 0.0
    %545 = vmatprep.subr.mxu0 0.0
    %546 = vmatpush1.msra.mxu0 0.0
    %547 = vmatprep.subr.mxu0 0.0
    %548 = vmatpush1.msra.mxu0 0.0
    %549 = vmatprep.subr.mxu0 0.0
    %550 = vmatpush1.msra.mxu0 0.0
    %551 = vmatprep.subr.mxu0 0.0
    %552 = vmatpush1.msra.mxu0 0.0
    %553 = vmatprep.subr.mxu0 0.0
    %554 = vmatpush1.msra.mxu0 0.0
    %555 = vmatprep.subr.mxu0 0.0
    %556 = vmatpush1.msra.mxu0 0.0
    %557 = vmatprep.subr.mxu0 0.0
    %558 = vmatpush1.msra.mxu0 %v520
    %559 = vmatprep.subr.mxu0 0.0
    %560 = vmatpush1.msra.mxu0 %v518
    %561 = vmatprep.subr.mxu0 0.0
    %562 = vmatpush2.msra.mxu0 0.0
    %563 = vmatprep.subr.mxu0 0.0
    %564 = vmatpush2.msra.mxu0 0.0
    %565 = vmatprep.subr.mxu0 0.0
    %566 = vmatpush2.msra.mxu0 0.0
    %567 = vmatprep.subr.mxu0 0.0
    %568 = vmatpush2.msra.mxu0 0.0
    %569 = vmatprep.subr.mxu0 0.0
    %570 = vmatpush2.msra.mxu0 0.0
    %571 = vmatprep.subr.mxu0 0.0
    %572 = vmatpush2.msra.mxu0 0.0
    %573 = vmatprep.subr.mxu0 0.0
    %574 = vmatpush2.msra.mxu0 0.0
    %575 = vmatprep.subr.mxu0 0.0
    %576 = vmatpush2.msra.mxu0 0.0
    %577 = vmatprep.subr.mxu0 0.0
    %578 = vmatpush2.msra.mxu0 0.0
    %579 = vmatprep.subr.mxu0 0.0
    %580 = vmatpush2.msra.mxu0 0.0
    %581 = vmatprep.subr.mxu0 0.0
    %582 = vmatpush2.msra.mxu0 0.0
    %583 = vmatprep.subr.mxu0 0.0
    %584 = vmatpush2.msra.mxu0 0.0
    %585 = vmatprep.subr.mxu0 0.0
    %586 = vmatpush2.msra.mxu0 0.0
    %587 = vmatprep.subr.mxu0 0.0
    %588 = vmatpush2.msra.mxu0 0.0
    %589 = vmatprep.subr.mxu0 0.0
    %590 = vmatpush2.msra.mxu0 0.0
    %591 = vmatprep.subr.mxu0 0.0
    %592 = vmatpush2.msra.mxu0 0.0
    %593 = vmatprep.mubr.f32.mxu0 0.0
    %594 = vmatmul.mubr.f32.gmra.mxu0 %v524
    %v595 = vpop.f32.mrf.mxu0
    %v596 = vadd.f32 %v507, %v595
    %v597 = vpop.f32.mrf.mxu0
    %598 = vmatprep.mubr.f32.mxu0 0.0
    %599 = vmatmul.mubr.f32.gmra.mxu0 %v527
    %v600 = vpop.f32.mrf.mxu0
    %v601 = vadd.f32 %v512, %v600
    %v602 = vpop.f32.mrf.mxu0
    %603 = vdwg.mxu0
    %vm604 = vcmp.ge.s32.totalorder %v174, 16
    %vm605 = vcmp.lt.s32.totalorder %v174, 24
    %vm606 = vmand %vm604, %vm605
    %v607 = vsel %vm606, 1, 0
    %v608 = vcvt.s32.f32 %v607
    %v609 = vmul.f32 %v163, %v608
    %v610 = vmul.f32 %v168, %v608
    %v612 = vsel %vm89, %v609, 0
    %v615 = vsel %vm89, %v610, 0
    %617 = vmatprep.subr.mxu0 0.0
    %618 = vmatpush1.xpose.msra.mxu0 0.0
    %619 = vmatprep.subr.mxu0 0.0
    %620 = vmatpush1.xpose.msra.mxu0 0.0
    %621 = vmatprep.subr.mxu0 0.0
    %622 = vmatpush1.xpose.msra.mxu0 0.0
    %623 = vmatprep.subr.mxu0 0.0
    %624 = vmatpush1.xpose.msra.mxu0 0.0
    %625 = vmatprep.subr.mxu0 0.0
    %626 = vmatpush1.xpose.msra.mxu0 0.0
    %627 = vmatprep.subr.mxu0 0.0
    %628 = vmatpush1.xpose.msra.mxu0 0.0
    %629 = vmatprep.subr.mxu0 0.0
    %630 = vmatpush1.xpose.msra.mxu0 0.0
    %631 = vmatprep.subr.mxu0 0.0
    %632 = vmatpush1.xpose.msra.mxu0 0.0
    %633 = vmatprep.subr.mxu0 0.0
    %634 = vmatpush1.xpose.msra.mxu0 0.0
    %635 = vmatprep.subr.mxu0 0.0
    %636 = vmatpush1.xpose.msra.mxu0 0.0
    %637 = vmatprep.subr.mxu0 0.0
    %638 = vmatpush1.xpose.msra.mxu0 0.0
    %639 = vmatprep.subr.mxu0 0.0
    %640 = vmatpush1.xpose.msra.mxu0 0.0
    %641 = vmatprep.subr.mxu0 0.0
    %642 = vmatpush1.xpose.msra.mxu0 0.0
    %643 = vmatprep.subr.mxu0 0.0
    %644 = vmatpush1.xpose.msra.mxu0 0.0
    %645 = vmatprep.subr.mxu0 0.0
    %646 = vmatpush1.xpose.msra.mxu0 %v196
    %647 = vmatprep.subr.mxu0 0.0
    %648 = vmatpush1.xpose.msra.mxu0 %v194
    %649 = vmatprep.subr.mxu0 0.0
    %650 = vmatpush2.xpose.msra.mxu0 0.0
    %651 = vmatprep.subr.mxu0 0.0
    %652 = vmatpush2.xpose.msra.mxu0 0.0
    %653 = vmatprep.subr.mxu0 0.0
    %654 = vmatpush2.xpose.msra.mxu0 0.0
    %655 = vmatprep.subr.mxu0 0.0
    %656 = vmatpush2.xpose.msra.mxu0 0.0
    %657 = vmatprep.subr.mxu0 0.0
    %658 = vmatpush2.xpose.msra.mxu0 0.0
    %659 = vmatprep.subr.mxu0 0.0
    %660 = vmatpush2.xpose.msra.mxu0 0.0
    %661 = vmatprep.subr.mxu0 0.0
    %662 = vmatpush2.xpose.msra.mxu0 0.0
    %663 = vmatprep.subr.mxu0 0.0
    %664 = vmatpush2.xpose.msra.mxu0 0.0
    %665 = vmatprep.subr.mxu0 0.0
    %666 = vmatpush2.xpose.msra.mxu0 0.0
    %667 = vmatprep.subr.mxu0 0.0
    %668 = vmatpush2.xpose.msra.mxu0 0.0
    %669 = vmatprep.subr.mxu0 0.0
    %670 = vmatpush2.xpose.msra.mxu0 0.0
    %671 = vmatprep.subr.mxu0 0.0
    %672 = vmatpush2.xpose.msra.mxu0 0.0
    %673 = vmatprep.subr.mxu0 0.0
    %674 = vmatpush2.xpose.msra.mxu0 0.0
    %675 = vmatprep.subr.mxu0 0.0
    %676 = vmatpush2.xpose.msra.mxu0 0.0
    %677 = vmatprep.subr.mxu0 0.0
    %678 = vmatpush2.xpose.msra.mxu0 0.0
    %679 = vmatprep.subr.mxu0 0.0
    %680 = vmatpush2.xpose.msra.mxu0 0.0
    %681 = vmatprep.mubr.f32.mxu0 0.0
    %682 = vmatmul.mubr.f32.gmra.mxu0 %v612
    %v683 = vpop.f32.mrf.mxu0
    %v684 = vadd.f32 0.0, %v683
    %v685 = vpop.f32.mrf.mxu0
    %686 = vmatprep.mubr.f32.mxu0 0.0
    %687 = vmatmul.mubr.f32.gmra.mxu0 %v615
    %v688 = vpop.f32.mrf.mxu0
    %v689 = vadd.f32 0.0, %v688
    %v690 = vpop.f32.mrf.mxu0
    %691 = vdwg.mxu0
    %v692 = vmul.f32 %v684, 0.35355338
    %v693 = vmul.f32 %v689, 0.35355338
    %v694 = vadd.f32 %v692, %v171
    %v695 = vadd.f32 %v693, %v172
    %v696 = vsel %vm277, %v694, -inf
    %697 = vmax.xlane.f32.xlu0 %v696
    %v698 = vpop.xlane.xlu0 %697
    %v699 = vsel %vm277, %v695, -inf
    %700 = vmax.xlane.f32.xlu0 %v699
    %v701 = vpop.xlane.xlu0 %700
    %v702 = vsub.f32 %v694, %v698
    %v703 = vsub.f32 %v695, %v701
    %v704 = vmul.f32 %v702, 1.442695
    %v705 = vpow.pop %v704
    %v706 = vmul.f32 %v703, 1.442695
    %v707 = vpow.pop %v706
    %v708 = vsel %vm277, %v705, 0.0
    %709 = vadd.xlane.f32.xlu0 %v708
    %v710 = vpop.xlane.xlu0 %709
    %v711 = vsel %vm277, %v707, 0.0
    %712 = vadd.xlane.f32.xlu0 %v711
    %v713 = vpop.xlane.xlu0 %712
    %v714 = vrcp.pop %v710
    %v715 = vmul.f32 %v705, %v714
    %v716 = vrcp.pop %v713
    %v717 = vmul.f32 %v707, %v716
    %719 = vrot.lane.b32.xlu0 %v608, 64
    %v720 = vpop.permute.xlu0 %719
    %v722 = vmul.f32 %v163, %v720
    %v723 = vmul.f32 %v168, %v720
    %726 = vrot.lane.b32.xlu0 %v722, 64
    %v727 = vpop.permute.xlu0 %726
    %728 = vrot.lane.b32.xlu0 %v723, 64
    %v729 = vpop.permute.xlu0 %728
    %v733 = vsel %vm277, %v715, 0
    %v736 = vsel %vm277, %v717, 0
    %738 = vmatprep.subr.mxu0 0.0
    %739 = vmatpush1.msra.mxu0 0.0
    %740 = vmatprep.subr.mxu0 0.0
    %741 = vmatpush1.msra.mxu0 0.0
    %742 = vmatprep.subr.mxu0 0.0
    %743 = vmatpush1.msra.mxu0 0.0
    %744 = vmatprep.subr.mxu0 0.0
    %745 = vmatpush1.msra.mxu0 0.0
    %746 = vmatprep.subr.mxu0 0.0
    %747 = vmatpush1.msra.mxu0 0.0
    %748 = vmatprep.subr.mxu0 0.0
    %749 = vmatpush1.msra.mxu0 0.0
    %750 = vmatprep.subr.mxu0 0.0
    %751 = vmatpush1.msra.mxu0 0.0
    %752 = vmatprep.subr.mxu0 0.0
    %753 = vmatpush1.msra.mxu0 0.0
    %754 = vmatprep.subr.mxu0 0.0
    %755 = vmatpush1.msra.mxu0 0.0
    %756 = vmatprep.subr.mxu0 0.0
    %757 = vmatpush1.msra.mxu0 0.0
    %758 = vmatprep.subr.mxu0 0.0
    %759 = vmatpush1.msra.mxu0 0.0
    %760 = vmatprep.subr.mxu0 0.0
    %761 = vmatpush1.msra.mxu0 0.0
    %762 = vmatprep.subr.mxu0 0.0
    %763 = vmatpush1.msra.mxu0 0.0
    %764 = vmatprep.subr.mxu0 0.0
    %765 = vmatpush1.msra.mxu0 0.0
    %766 = vmatprep.subr.mxu0 0.0
    %767 = vmatpush1.msra.mxu0 %v729
    %768 = vmatprep.subr.mxu0 0.0
    %769 = vmatpush1.msra.mxu0 %v727
    %770 = vmatprep.subr.mxu0 0.0
    %771 = vmatpush2.msra.mxu0 0.0
    %772 = vmatprep.subr.mxu0 0.0
    %773 = vmatpush2.msra.mxu0 0.0
    %774 = vmatprep.subr.mxu0 0.0
    %775 = vmatpush2.msra.mxu0 0.0
    %776 = vmatprep.subr.mxu0 0.0
    %777 = vmatpush2.msra.mxu0 0.0
    %778 = vmatprep.subr.mxu0 0.0
    %779 = vmatpush2.msra.mxu0 0.0
    %780 = vmatprep.subr.mxu0 0.0
    %781 = vmatpush2.msra.mxu0 0.0
    %782 = vmatprep.subr.mxu0 0.0
    %783 = vmatpush2.msra.mxu0 0.0
    %784 = vmatprep.subr.mxu0 0.0
    %785 = vmatpush2.msra.mxu0 0.0
    %786 = vmatprep.subr.mxu0 0.0
    %787 = vmatpush2.msra.mxu0 0.0
    %788 = vmatprep.subr.mxu0 0.0
    %789 = vmatpush2.msra.mxu0 0.0
    %790 = vmatprep.subr.mxu0 0.0
    %791 = vmatpush2.msra.mxu0 0.0
    %792 = vmatprep.subr.mxu0 0.0
    %793 = vmatpush2.msra.mxu0 0.0
    %794 = vmatprep.subr.mxu0 0.0
    %795 = vmatpush2.msra.mxu0 0.0
    %796 = vmatprep.subr.mxu0 0.0
    %797 = vmatpush2.msra.mxu0 0.0
    %798 = vmatprep.subr.mxu0 0.0
    %799 = vmatpush2.msra.mxu0 0.0
    %800 = vmatprep.subr.mxu0 0.0
    %801 = vmatpush2.msra.mxu0 0.0
    %802 = vmatprep.mubr.f32.mxu0 0.0
    %803 = vmatmul.mubr.f32.gmra.mxu0 %v733
    %v804 = vpop.f32.mrf.mxu0
    %v805 = vadd.f32 0.0, %v804
    %v806 = vpop.f32.mrf.mxu0
    %807 = vmatprep.mubr.f32.mxu0 0.0
    %808 = vmatmul.mubr.f32.gmra.mxu0 %v736
    %v809 = vpop.f32.mrf.mxu0
    %v810 = vadd.f32 0.0, %v809
    %v811 = vpop.f32.mrf.mxu0
    %812 = vdwg.mxu0
    %v813 = vadd.f32 %v596, %v805
    %v814 = vadd.f32 %v601, %v810
    %vm815 = vcmp.ge.s32.totalorder %v174, 24
    %vm816 = vcmp.lt.s32.totalorder %v174, 32
    %vm817 = vmand %vm815, %vm816
    %v818 = vsel %vm817, 1, 0
    %v819 = vcvt.s32.f32 %v818
    %v820 = vmul.f32 %v163, %v819
    %v821 = vmul.f32 %v168, %v819
    %v823 = vsel %vm89, %v820, 0
    %v826 = vsel %vm89, %v821, 0
    %828 = vmatprep.subr.mxu0 0.0
    %829 = vmatpush1.xpose.msra.mxu0 0.0
    %830 = vmatprep.subr.mxu0 0.0
    %831 = vmatpush1.xpose.msra.mxu0 0.0
    %832 = vmatprep.subr.mxu0 0.0
    %833 = vmatpush1.xpose.msra.mxu0 0.0
    %834 = vmatprep.subr.mxu0 0.0
    %835 = vmatpush1.xpose.msra.mxu0 0.0
    %836 = vmatprep.subr.mxu0 0.0
    %837 = vmatpush1.xpose.msra.mxu0 0.0
    %838 = vmatprep.subr.mxu0 0.0
    %839 = vmatpush1.xpose.msra.mxu0 0.0
    %840 = vmatprep.subr.mxu0 0.0
    %841 = vmatpush1.xpose.msra.mxu0 0.0
    %842 = vmatprep.subr.mxu0 0.0
    %843 = vmatpush1.xpose.msra.mxu0 0.0
    %844 = vmatprep.subr.mxu0 0.0
    %845 = vmatpush1.xpose.msra.mxu0 0.0
    %846 = vmatprep.subr.mxu0 0.0
    %847 = vmatpush1.xpose.msra.mxu0 0.0
    %848 = vmatprep.subr.mxu0 0.0
    %849 = vmatpush1.xpose.msra.mxu0 0.0
    %850 = vmatprep.subr.mxu0 0.0
    %851 = vmatpush1.xpose.msra.mxu0 0.0
    %852 = vmatprep.subr.mxu0 0.0
    %853 = vmatpush1.xpose.msra.mxu0 0.0
    %854 = vmatprep.subr.mxu0 0.0
    %855 = vmatpush1.xpose.msra.mxu0 0.0
    %856 = vmatprep.subr.mxu0 0.0
    %857 = vmatpush1.xpose.msra.mxu0 %v196
    %858 = vmatprep.subr.mxu0 0.0
    %859 = vmatpush1.xpose.msra.mxu0 %v194
    %860 = vmatprep.subr.mxu0 0.0
    %861 = vmatpush2.xpose.msra.mxu0 0.0
    %862 = vmatprep.subr.mxu0 0.0
    %863 = vmatpush2.xpose.msra.mxu0 0.0
    %864 = vmatprep.subr.mxu0 0.0
    %865 = vmatpush2.xpose.msra.mxu0 0.0
    %866 = vmatprep.subr.mxu0 0.0
    %867 = vmatpush2.xpose.msra.mxu0 0.0
    %868 = vmatprep.subr.mxu0 0.0
    %869 = vmatpush2.xpose.msra.mxu0 0.0
    %870 = vmatprep.subr.mxu0 0.0
    %871 = vmatpush2.xpose.msra.mxu0 0.0
    %872 = vmatprep.subr.mxu0 0.0
    %873 = vmatpush2.xpose.msra.mxu0 0.0
    %874 = vmatprep.subr.mxu0 0.0
    %875 = vmatpush2.xpose.msra.mxu0 0.0
    %876 = vmatprep.subr.mxu0 0.0
    %877 = vmatpush2.xpose.msra.mxu0 0.0
    %878 = vmatprep.subr.mxu0 0.0
    %879 = vmatpush2.xpose.msra.mxu0 0.0
    %880 = vmatprep.subr.mxu0 0.0
    %881 = vmatpush2.xpose.msra.mxu0 0.0
    %882 = vmatprep.subr.mxu0 0.0
    %883 = vmatpush2.xpose.msra.mxu0 0.0
    %884 = vmatprep.subr.mxu0 0.0
    %885 = vmatpush2.xpose.msra.mxu0 0.0
    %886 = vmatprep.subr.mxu0 0.0
    %887 = vmatpush2.xpose.msra.mxu0 0.0
    %888 = vmatprep.subr.mxu0 0.0
    %889 = vmatpush2.xpose.msra.mxu0 0.0
    %890 = vmatprep.subr.mxu0 0.0
    %891 = vmatpush2.xpose.msra.mxu0 0.0
    %892 = vmatprep.mubr.f32.mxu0 0.0
    %893 = vmatmul.mubr.f32.gmra.mxu0 %v823
    %v894 = vpop.f32.mrf.mxu0
    %v895 = vadd.f32 0.0, %v894
    %v896 = vpop.f32.mrf.mxu0
    %897 = vmatprep.mubr.f32.mxu0 0.0
    %898 = vmatmul.mubr.f32.gmra.mxu0 %v826
    %v899 = vpop.f32.mrf.mxu0
    %v900 = vadd.f32 0.0, %v899
    %v901 = vpop.f32.mrf.mxu0
    %902 = vdwg.mxu0
    %v903 = vmul.f32 %v895, 0.35355338
    %v904 = vmul.f32 %v900, 0.35355338
    %v905 = vadd.f32 %v903, %v171
    %v906 = vadd.f32 %v904, %v172
    %v907 = vsel %vm277, %v905, -inf
    %908 = vmax.xlane.f32.xlu0 %v907
    %v909 = vpop.xlane.xlu0 %908
    %v910 = vsel %vm277, %v906, -inf
    %911 = vmax.xlane.f32.xlu0 %v910
    %v912 = vpop.xlane.xlu0 %911
    %v913 = vsub.f32 %v905, %v909
    %v914 = vsub.f32 %v906, %v912
    %v915 = vmul.f32 %v913, 1.442695
    %v916 = vpow.pop %v915
    %v917 = vmul.f32 %v914, 1.442695
    %v918 = vpow.pop %v917
    %v919 = vsel %vm277, %v916, 0.0
    %920 = vadd.xlane.f32.xlu0 %v919
    %v921 = vpop.xlane.xlu0 %920
    %v922 = vsel %vm277, %v918, 0.0
    %923 = vadd.xlane.f32.xlu0 %v922
    %v924 = vpop.xlane.xlu0 %923
    %v925 = vrcp.pop %v921
    %v926 = vmul.f32 %v916, %v925
    %v927 = vrcp.pop %v924
    %v928 = vmul.f32 %v918, %v927
    %930 = vrot.lane.b32.xlu0 %v819, 64
    %v931 = vpop.permute.xlu0 %930
    %v933 = vmul.f32 %v163, %v931
    %v934 = vmul.f32 %v168, %v931
    %937 = vrot.lane.b32.xlu0 %v933, 64
    %v938 = vpop.permute.xlu0 %937
    %939 = vrot.lane.b32.xlu0 %v934, 64
    %v940 = vpop.permute.xlu0 %939
    %v944 = vsel %vm277, %v926, 0
    %v947 = vsel %vm277, %v928, 0
    %949 = vmatprep.subr.mxu0 0.0
    %950 = vmatpush1.msra.mxu0 0.0
    %951 = vmatprep.subr.mxu0 0.0
    %952 = vmatpush1.msra.mxu0 0.0
    %953 = vmatprep.subr.mxu0 0.0
    %954 = vmatpush1.msra.mxu0 0.0
    %955 = vmatprep.subr.mxu0 0.0
    %956 = vmatpush1.msra.mxu0 0.0
    %957 = vmatprep.subr.mxu0 0.0
    %958 = vmatpush1.msra.mxu0 0.0
    %959 = vmatprep.subr.mxu0 0.0
    %960 = vmatpush1.msra.mxu0 0.0
    %961 = vmatprep.subr.mxu0 0.0
    %962 = vmatpush1.msra.mxu0 0.0
    %963 = vmatprep.subr.mxu0 0.0
    %964 = vmatpush1.msra.mxu0 0.0
    %965 = vmatprep.subr.mxu0 0.0
    %966 = vmatpush1.msra.mxu0 0.0
    %967 = vmatprep.subr.mxu0 0.0
    %968 = vmatpush1.msra.mxu0 0.0
    %969 = vmatprep.subr.mxu0 0.0
    %970 = vmatpush1.msra.mxu0 0.0
    %971 = vmatprep.subr.mxu0 0.0
    %972 = vmatpush1.msra.mxu0 0.0
    %973 = vmatprep.subr.mxu0 0.0
    %974 = vmatpush1.msra.mxu0 0.0
    %975 = vmatprep.subr.mxu0 0.0
    %976 = vmatpush1.msra.mxu0 0.0
    %977 = vmatprep.subr.mxu0 0.0
    %978 = vmatpush1.msra.mxu0 %v940
    %979 = vmatprep.subr.mxu0 0.0
    %980 = vmatpush1.msra.mxu0 %v938
    %981 = vmatprep.subr.mxu0 0.0
    %982 = vmatpush2.msra.mxu0 0.0
    %983 = vmatprep.subr.mxu0 0.0
    %984 = vmatpush2.msra.mxu0 0.0
    %985 = vmatprep.subr.mxu0 0.0
    %986 = vmatpush2.msra.mxu0 0.0
    %987 = vmatprep.subr.mxu0 0.0
    %988 = vmatpush2.msra.mxu0 0.0
    %989 = vmatprep.subr.mxu0 0.0
    %990 = vmatpush2.msra.mxu0 0.0
    %991 = vmatprep.subr.mxu0 0.0
    %992 = vmatpush2.msra.mxu0 0.0
    %993 = vmatprep.subr.mxu0 0.0
    %994 = vmatpush2.msra.mxu0 0.0
    %995 = vmatprep.subr.mxu0 0.0
    %996 = vmatpush2.msra.mxu0 0.0
    %997 = vmatprep.subr.mxu0 0.0
    %998 = vmatpush2.msra.mxu0 0.0
    %999 = vmatprep.subr.mxu0 0.0
    %1000 = vmatpush2.msra.mxu0 0.0
    %1001 = vmatprep.subr.mxu0 0.0
    %1002 = vmatpush2.msra.mxu0 0.0
    %1003 = vmatprep.subr.mxu0 0.0
    %1004 = vmatpush2.msra.mxu0 0.0
    %1005 = vmatprep.subr.mxu0 0.0
    %1006 = vmatpush2.msra.mxu0 0.0
    %1007 = vmatprep.subr.mxu0 0.0
    %1008 = vmatpush2.msra.mxu0 0.0
    %1009 = vmatprep.subr.mxu0 0.0
    %1010 = vmatpush2.msra.mxu0 0.0
    %1011 = vmatprep.subr.mxu0 0.0
    %1012 = vmatpush2.msra.mxu0 0.0
    %1013 = vmatprep.mubr.f32.mxu0 0.0
    %1014 = vmatmul.mubr.f32.gmra.mxu0 %v944
    %v1015 = vpop.f32.mrf.mxu0
    %v1016 = vadd.f32 0.0, %v1015
    %v1017 = vpop.f32.mrf.mxu0
    %1018 = vmatprep.mubr.f32.mxu0 0.0
    %1019 = vmatmul.mubr.f32.gmra.mxu0 %v947
    %v1020 = vpop.f32.mrf.mxu0
    %v1021 = vadd.f32 0.0, %v1020
    %v1022 = vpop.f32.mrf.mxu0
    %1023 = vdwg.mxu0
    %v1024 = vadd.f32 %v813, %v1016
    %v1025 = vadd.f32 %v814, %v1021
    %v1026 = vld [vmem:[%s4] sm:$0xff]
    %v1027 = vld [vmem:[%s4 + $0x8] sm:$0xff]
    %v1028 = vld [vmem:[%s4 + $0x10] sm:$0xff]
    %v1029 = vld [vmem:[%s4 + $0x18] sm:$0xff]
    %v1030 = vld [vmem:[%s5] sm:$0x1]
    %v1032 = vlaneseq
    %v1033 = vshrl.u32 %v1032, 7
    %v1034 = vsub.s32 0, %v1033
    %v1035 = vrot.slane %v1030, %v1034
    %v1038 = vsel %vm89, %v1024, 0
    %v1041 = vsel %vm89, %v1025, 0
    %1043 = vmatprep.subr.mxu0 0.0
    %1044 = vmatpush1.msra.mxu0 0.0
    %1045 = vmatprep.subr.mxu0 0.0
    %1046 = vmatpush1.msra.mxu0 0.0
    %1047 = vmatprep.subr.mxu0 0.0
    %1048 = vmatpush1.msra.mxu0 0.0
    %1049 = vmatprep.subr.mxu0 0.0
    %1050 = vmatpush1.msra.mxu0 0.0
    %1051 = vmatprep.subr.mxu0 0.0
    %1052 = vmatpush1.msra.mxu0 0.0
    %1053 = vmatprep.subr.mxu0 0.0
    %1054 = vmatpush1.msra.mxu0 0.0
    %1055 = vmatprep.subr.mxu0 0.0
    %1056 = vmatpush1.msra.mxu0 0.0
    %1057 = vmatprep.subr.mxu0 0.0
    %1058 = vmatpush1.msra.mxu0 0.0
    %1059 = vmatprep.subr.mxu0 0.0
    %1060 = vmatpush1.msra.mxu0 0.0
    %1061 = vmatprep.subr.mxu0 0.0
    %1062 = vmatpush1.msra.mxu0 0.0
    %1063 = vmatprep.subr.mxu0 0.0
    %1064 = vmatpush1.msra.mxu0 0.0
    %1065 = vmatprep.subr.mxu0 0.0
    %1066 = vmatpush1.msra.mxu0 0.0
    %1067 = vmatprep.subr.mxu0 0.0
    %1068 = vmatpush1.msra.mxu0 %v1029
    %1069 = vmatprep.subr.mxu0 0.0
    %1070 = vmatpush1.msra.mxu0 %v1028
    %1071 = vmatprep.subr.mxu0 0.0
    %1072 = vmatpush1.msra.mxu0 %v1027
    %1073 = vmatprep.subr.mxu0 0.0
    %1074 = vmatpush1.msra.mxu0 %v1026
    %1075 = vmatprep.subr.mxu0 0.0
    %1076 = vmatpush2.msra.mxu0 0.0
    %1077 = vmatprep.subr.mxu0 0.0
    %1078 = vmatpush2.msra.mxu0 0.0
    %1079 = vmatprep.subr.mxu0 0.0
    %1080 = vmatpush2.msra.mxu0 0.0
    %1081 = vmatprep.subr.mxu0 0.0
    %1082 = vmatpush2.msra.mxu0 0.0
    %1083 = vmatprep.subr.mxu0 0.0
    %1084 = vmatpush2.msra.mxu0 0.0
    %1085 = vmatprep.subr.mxu0 0.0
    %1086 = vmatpush2.msra.mxu0 0.0
    %1087 = vmatprep.subr.mxu0 0.0
    %1088 = vmatpush2.msra.mxu0 0.0
    %1089 = vmatprep.subr.mxu0 0.0
    %1090 = vmatpush2.msra.mxu0 0.0
    %1091 = vmatprep.subr.mxu0 0.0
    %1092 = vmatpush2.msra.mxu0 0.0
    %1093 = vmatprep.subr.mxu0 0.0
    %1094 = vmatpush2.msra.mxu0 0.0
    %1095 = vmatprep.subr.mxu0 0.0
    %1096 = vmatpush2.msra.mxu0 0.0
    %1097 = vmatprep.subr.mxu0 0.0
    %1098 = vmatpush2.msra.mxu0 0.0
    %1099 = vmatprep.subr.mxu0 0.0
    %1100 = vmatpush2.msra.mxu0 0.0
    %1101 = vmatprep.subr.mxu0 0.0
    %1102 = vmatpush2.msra.mxu0 0.0
    %1103 = vmatprep.subr.mxu0 0.0
    %1104 = vmatpush2.msra.mxu0 0.0
    %1105 = vmatprep.subr.mxu0 0.0
    %1106 = vmatpush2.msra.mxu0 0.0
    %1107 = vmatprep.mubr.f32.mxu0 0.0
    %1108 = vmatmul.mubr.f32.gmra.mxu0 %v1038
    %v1109 = vpop.f32.mrf.mxu0
    %v1110 = vadd.f32 %v1035, %v1109
    %v1111 = vpop.f32.mrf.mxu0
    %1112 = vmatprep.mubr.f32.mxu0 0.0
    %1113 = vmatmul.mubr.f32.gmra.mxu0 %v1041
    %v1114 = vpop.f32.mrf.mxu0
    %v1115 = vadd.f32 %v1035, %v1114
    %v1116 = vpop.f32.mrf.mxu0
    %1117 = vdwg.mxu0
    %v1118 = vadd.f32 %v1110, %v76
    %v1119 = vadd.f32 %v1115, %v77
    %v1120 = vld [vmem:[%s6] sm:$0x1]
    %v1121 = vld [vmem:[%s7] sm:$0x1]
    %v1122 = vsel %vm89, %v1118, 0.0
    %1123 = vadd.xlane.f32.xlu0 %v1122
    %v1124 = vpop.xlane.xlu0 %1123
    %v1125 = vsel %vm89, %v1119, 0.0
    %1126 = vadd.xlane.f32.xlu0 %v1125
    %v1127 = vpop.xlane.xlu0 %1126
    %v1128 = vrcp.pop 32.0
    %v1129 = vmul.f32 %v1124, %v1128
    %v1130 = vmul.f32 %v1127, %v1128
    %v1131 = vsub.f32 %v1118, %v1129
    %v1132 = vsub.f32 %v1119, %v1130
    %v1133 = vmul.f32 %v1131, %v1131
    %v1134 = vmul.f32 %v1132, %v1132
    %v1135 = vsel %vm89, %v1133, 0.0
    %1136 = vadd.xlane.f32.xlu0 %v1135
    %v1137 = vpop.xlane.xlu0 %1136
    %v1138 = vsel %vm89, %v1134, 0.0
    %1139 = vadd.xlane.f32.xlu0 %v1138
    %v1140 = vpop.xlane.xlu0 %1139
    %v1141 = vmul.f32 %v1137, %v1128
    %v1142 = vmul.f32 %v1140, %v1128
    %v1143 = vadd.f32 %v1141, 1e-05
    %v1144 = vadd.f32 %v1142, 1e-05
    %v1145 = vrsqrt.pop %v1143
    %v1146 = vrsqrt.pop %v1144
    %v1147 = vmul.f32 %v1131, %v1145
    %v1148 = vmul.f32 %v1132, %v1146
    %v1150 = vlaneseq
    %v1151 = vshrl.u32 %v1150, 7
    %v1152 = vsub.s32 0, %v1151
    %v1153 = vrot.slane %v1120, %v1152
    %v1155 = vmul.f32 %v1153, %v1147
    %v1156 = vmul.f32 %v1153, %v1148
    %v1158 = vlaneseq
    %v1159 = vshrl.u32 %v1158, 7
    %v1160 = vsub.s32 0, %v1159
    %v1161 = vrot.slane %v1121, %v1160
    %v1163 = vadd.f32 %v1155, %v1161
    %v1164 = vadd.f32 %v1156, %v1161
    %v1165 = vld [vmem:[%s8] sm:$0xff]
    %v1166 = vld [vmem:[%s8 + $0x8] sm:$0xff]
    %v1167 = vld [vmem:[%s8 + $0x10] sm:$0xff]
    %v1168 = vld [vmem:[%s8 + $0x18] sm:$0xff]
    %v1169 = vld [vmem:[%s9] sm:$0x1]
    %v1171 = vlaneseq
    %v1172 = vshrl.u32 %v1171, 7
    %v1173 = vsub.s32 0, %v1172
    %v1174 = vrot.slane %v1169, %v1173
    %v1177 = vsel %vm89, %v1163, 0
    %v1180 = vsel %vm89, %v1164, 0
    %1182 = vmatprep.subr.mxu0 0.0
    %1183 = vmatpush1.msra.mxu0 0.0
    %1184 = vmatprep.subr.mxu0 0.0
    %1185 = vmatpush1.msra.mxu0 0.0
    %1186 = vmatprep.subr.mxu0 0.0
    %1187 = vmatpush1.msra.mxu0 0.0
    %1188 = vmatprep.subr.mxu0 0.0
    %1189 = vmatpush1.msra.mxu0 0.0
    %1190 = vmatprep.subr.mxu0 0.0
    %1191 = vmatpush1.msra.mxu0 0.0
    %1192 = vmatprep.subr.mxu0 0.0
    %1193 = vmatpush1.msra.mxu0 0.0
    %1194 = vmatprep.subr.mxu0 0.0
    %1195 = vmatpush1.msra.mxu0 0.0
    %1196 = vmatprep.subr.mxu0 0.0
    %1197 = vmatpush1.msra.mxu0 0.0
    %1198 = vmatprep.subr.mxu0 0.0
    %1199 = vmatpush1.msra.mxu0 0.0
    %1200 = vmatprep.subr.mxu0 0.0
    %1201 = vmatpush1.msra.mxu0 0.0
    %1202 = vmatprep.subr.mxu0 0.0
    %1203 = vmatpush1.msra.mxu0 0.0
    %1204 = vmatprep.subr.mxu0 0.0
    %1205 = vmatpush1.msra.mxu0 0.0
    %1206 = vmatprep.subr.mxu0 0.0
    %1207 = vmatpush1.msra.mxu0 %v1168
    %1208 = vmatprep.subr.mxu0 0.0
    %1209 = vmatpush1.msra.mxu0 %v1167
    %1210 = vmatprep.subr.mxu0 0.0
    %1211 = vmatpush1.msra.mxu0 %v1166
    %1212 = vmatprep.subr.mxu0 0.0
    %1213 = vmatpush1.msra.mxu0 %v1165
    %1214 = vmatprep.subr.mxu0 0.0
    %1215 = vmatpush2.msra.mxu0 0.0
    %1216 = vmatprep.subr.mxu0 0.0
    %1217 = vmatpush2.msra.mxu0 0.0
    %1218 = vmatprep.subr.mxu0 0.0
    %1219 = vmatpush2.msra.mxu0 0.0
    %1220 = vmatprep.subr.mxu0 0.0
    %1221 = vmatpush2.msra.mxu0 0.0
    %1222 = vmatprep.subr.mxu0 0.0
    %1223 = vmatpush2.msra.mxu0 0.0
    %1224 = vmatprep.subr.mxu0 0.0
    %1225 = vmatpush2.msra.mxu0 0.0
    %1226 = vmatprep.subr.mxu0 0.0
    %1227 = vmatpush2.msra.mxu0 0.0
    %1228 = vmatprep.subr.mxu0 0.0
    %1229 = vmatpush2.msra.mxu0 0.0
    %1230 = vmatprep.subr.mxu0 0.0
    %1231 = vmatpush2.msra.mxu0 0.0
    %1232 = vmatprep.subr.mxu0 0.0
    %1233 = vmatpush2.msra.mxu0 0.0
    %1234 = vmatprep.subr.mxu0 0.0
    %1235 = vmatpush2.msra.mxu0 0.0
    %1236 = vmatprep.subr.mxu0 0.0
    %1237 = vmatpush2.msra.mxu0 0.0
    %1238 = vmatprep.subr.mxu0 0.0
    %1239 = vmatpush2.msra.mxu0 0.0
    %1240 = vmatprep.subr.mxu0 0.0
    %1241 = vmatpush2.msra.mxu0 0.0
    %1242 = vmatprep.subr.mxu0 0.0
    %1243 = vmatpush2.msra.mxu0 0.0
    %1244 = vmatprep.subr.mxu0 0.0
    %1245 = vmatpush2.msra.mxu0 0.0
    %1246 = vmatprep.mubr.f32.mxu0 0.0
    %1247 = vmatmul.mubr.f32.gmra.mxu0 %v1177
    %v1248 = vpop.f32.mrf.mxu0
    %v1249 = vadd.f32 %v1174, %v1248
    %v1250 = vpop.f32.mrf.mxu0
    %1251 = vmatprep.mubr.f32.mxu0 0.0
    %1252 = vmatmul.mubr.f32.gmra.mxu0 %v1180
    %v1253 = vpop.f32.mrf.mxu0
    %v1254 = vadd.f32 %v1174, %v1253
    %v1255 = vpop.f32.mrf.mxu0
    %1256 = vdwg.mxu0
    %v1257 = vmax.f32 %v1249, 0.0
    %v1258 = vmax.f32 %v1254, 0.0
    %v1259 = vld [vmem:[%s10] sm:$0xff]
    %v1260 = vld [vmem:[%s10 + $0x8] sm:$0xff]
    %v1261 = vld [vmem:[%s10 + $0x10] sm:$0xff]
    %v1262 = vld [vmem:[%s10 + $0x18] sm:$0xff]
    %v1263 = vld [vmem:[%s10 + $0x20] sm:$0xff]
    %v1264 = vld [vmem:[%s10 + $0x28] sm:$0xff]
    %v1265 = vld [vmem:[%s10 + $0x30] sm:$0xff]
    %v1266 = vld [vmem:[%s10 + $0x38] sm:$0xff]
    %v1267 = vld [vmem:[%s11] sm:$0x1]
    %v1269 = vlaneseq
    %v1270 = vshrl.u32 %v1269, 7
    %v1271 = vsub.s32 0, %v1270
    %v1272 = vrot.slane %v1267, %v1271
    %vm1274 = vcmask 523264
    %v1276 = vsel %vm1274, %v1257, 0
    %v1279 = vsel %vm1274, %v1258, 0
    %1281 = vmatprep.subr.mxu0 0.0
    %1282 = vmatpush1.msra.mxu0 0.0
    %1283 = vmatprep.subr.mxu0 0.0
    %1284 = vmatpush1.msra.mxu0 0.0
    %1285 = vmatprep.subr.mxu0 0.0
    %1286 = vmatpush1.msra.mxu0 0.0
    %1287 = vmatprep.subr.mxu0 0.0
    %1288 = vmatpush1.msra.mxu0 0.0
    %1289 = vmatprep.subr.mxu0 0.0
    %1290 = vmatpush1.msra.mxu0 0.0
    %1291 = vmatprep.subr.mxu0 0.0
    %1292 = vmatpush1.msra.mxu0 0.0
    %1293 = vmatprep.subr.mxu0 0.0
    %1294 = vmatpush1.msra.mxu0 0.0
    %1295 = vmatprep.subr.mxu0 0.0
    %1296 = vmatpush1.msra.mxu0 0.0
    %1297 = vmatprep.subr.mxu0 0.0
    %1298 = vmatpush1.msra.mxu0 %v1266
    %1299 = vmatprep.subr.mxu0 0.0
    %1300 = vmatpush1.msra.mxu0 %v1265
    %1301 = vmatprep.subr.mxu0 0.0
    %1302 = vmatpush1.msra.mxu0 %v1264
    %1303 = vmatprep.subr.mxu0 0.0
    %1304 = vmatpush1.msra.mxu0 %v1263
    %1305 = vmatprep.subr.mxu0 0.0
    %1306 = vmatpush1.msra.mxu0 %v1262
    %1307 = vmatprep.subr.mxu0 0.0
    %1308 = vmatpush1.msra.mxu0 %v1261
    %1309 = vmatprep.subr.mxu0 0.0
    %1310 = vmatpush1.msra.mxu0 %v1260
    %1311 = vmatprep.subr.mxu0 0.0
    %1312 = vmatpush1.msra.mxu0 %v1259
    %1313 = vmatprep.subr.mxu0 0.0
    %1314 = vmatpush2.msra.mxu0 0.0
    %1315 = vmatprep.subr.mxu0 0.0
    %1316 = vmatpush2.msra.mxu0 0.0
    %1317 = vmatprep.subr.mxu0 0.0
    %1318 = vmatpush2.msra.mxu0 0.0
    %1319 = vmatprep.subr.mxu0 0.0
    %1320 = vmatpush2.msra.mxu0 0.0
    %1321 = vmatprep.subr.mxu0 0.0
    %1322 = vmatpush2.msra.mxu0 0.0
    %1323 = vmatprep.subr.mxu0 0.0
    %1324 = vmatpush2.msra.mxu0 0.0
    %1325 = vmatprep.subr.mxu0 0.0
    %1326 = vmatpush2.msra.mxu0 0.0
    %1327 = vmatprep.subr.mxu0 0.0
    %1328 = vmatpush2.msra.mxu0 0.0
    %1329 = vmatprep.subr.mxu0 0.0
    %1330 = vmatpush2.msra.mxu0 0.0
    %1331 = vmatprep.subr.mxu0 0.0
    %1332 = vmatpush2.msra.mxu0 0.0
    %1333 = vmatprep.subr.mxu0 0.0
    %1334 = vmatpush2.msra.mxu0 0.0
    %1335 = vmatprep.subr.mxu0 0.0
    %1336 = vmatpush2.msra.mxu0 0.0
    %1337 = vmatprep.subr.mxu0 0.0
    %1338 = vmatpush2.msra.mxu0 0.0
    %1339 = vmatprep.subr.mxu0 0.0
    %1340 = vmatpush2.msra.mxu0 0.0
    %1341 = vmatprep.subr.mxu0 0.0
    %1342 = vmatpush2.msra.mxu0 0.0
    %1343 = vmatprep.subr.mxu0 0.0
    %1344 = vmatpush2.msra.mxu0 0.0
    %1345 = vmatprep.mubr.f32.mxu0 0.0
    %1346 = vmatmul.mubr.f32.gmra.mxu0 %v1276
    %v1347 = vpop.f32.mrf.mxu0
    %v1348 = vadd.f32 %v1272, %v1347
    %v1349 = vpop.f32.mrf.mxu0
    %1350 = vmatprep.mubr.f32.mxu0 0.0
    %1351 = vmatmul.mubr.f32.gmra.mxu0 %v1279
    %v1352 = vpop.f32.mrf.mxu0
    %v1353 = vadd.f32 %v1272, %v1352
    %v1354 = vpop.f32.mrf.mxu0
    %1355 = vdwg.mxu0
    %v1356 = vadd.f32 %v1348, %v1163
    %v1357 = vadd.f32 %v1353, %v1164
    %v1358 = vld [vmem:[%s12] sm:$0x1]
    %v1359 = vld [vmem:[%s13] sm:$0x1]
    %v1360 = vsel %vm89, %v1356, 0.0
    %1361 = vadd.xlane.f32.xlu0 %v1360
    %v1362 = vpop.xlane.xlu0 %1361
    %v1363 = vsel %vm89, %v1357, 0.0
    %1364 = vadd.xlane.f32.xlu0 %v1363
    %v1365 = vpop.xlane.xlu0 %1364
    %v1366 = vmul.f32 %v1362, %v1128
    %v1367 = vmul.f32 %v1365, %v1128
    %v1368 = vsub.f32 %v1356, %v1366
    %v1369 = vsub.f32 %v1357, %v1367
    %v1370 = vmul.f32 %v1368, %v1368
    %v1371 = vmul.f32 %v1369, %v1369
    %v1372 = vsel %vm89, %v1370, 0.0
    %1373 = vadd.xlane.f32.xlu0 %v1372
    %v1374 = vpop.xlane.xlu0 %1373
    %v1375 = vsel %vm89, %v1371, 0.0
    %1376 = vadd.xlane.f32.xlu0 %v1375
    %v1377 = vpop.xlane.xlu0 %1376
    %v1378 = vmul.f32 %v1374, %v1128
    %v1379 = vmul.f32 %v1377, %v1128
    %v1380 = vadd.f32 %v1378, 1e-05
    %v1381 = vadd.f32 %v1379, 1e-05
    %v1382 = vrsqrt.pop %v1380
    %v1383 = vrsqrt.pop %v1381
    %v1384 = vmul.f32 %v1368, %v1382
    %v1385 = vmul.f32 %v1369, %v1383
    %v1387 = vlaneseq
    %v1388 = vshrl.u32 %v1387, 7
    %v1389 = vsub.s32 0, %v1388
    %v1390 = vrot.slane %v1358, %v1389
    %v1392 = vmul.f32 %v1390, %v1384
    %v1393 = vmul.f32 %v1390, %v1385
    %v1395 = vlaneseq
    %v1396 = vshrl.u32 %v1395, 7
    %v1397 = vsub.s32 0, %v1396
    %v1398 = vrot.slane %v1359, %v1397
    %v1400 = vadd.f32 %v1392, %v1398
    %v1401 = vadd.f32 %v1393, %v1398
    %1402 = vst.msk [vmem:[#allocation7] sm:$0xff] %vm89, %v1400
    %1403 = vst.msk [vmem:[#allocation7 + $0x8] sm:$0xff] %vm89, %v1401
    // Predicated region
    $region66: #{tpu_custom_call.1} parent=1 // pred_check
      _
    $region67: #{tpu_custom_call.1} parent=1 // pred_check_branch
      %1405 = sbr.rel (0) target = $region69
    $region68: #{tpu_custom_call.1} parent=1 // pred_region
      %s1407 = ssub.s32 256, 256
      %1408 = vsyncadd [#allocation4], %s1407
      %s1409 = sshll.u32 [#allocation7], 4
      %s1410 = int_to_ptr.vmem [resolvable:$true] %s1409
      %1415 = dma.vmem_to_hbm [thread:$0]  %s1410, 256, %s14, [#allocation4], 128, 128, 8
    $region69: #{tpu_custom_call.1} parent=1 // pred_fallthru
      _
    // Predicated region
    $region70: #{tpu_custom_call.1} parent=1 // pred_check
      _
    $region71: #{tpu_custom_call.1} parent=1 // pred_check_branch
      %1417 = sbr.rel (0) target = $region73
    $region72: #{tpu_custom_call.1} parent=1 // pred_region
      %1418 = dma.done [#allocation4], 256
    $region73: #{tpu_custom_call.1} parent=1 // pred_fallthru
      _
    %1419 = vsyncpa [#allocation3], 1
    %1420 = vsyncpa [#allocation6], 1
    %1421 = vsyncpa [#allocation4], 1

</llo_original>
